<compile_context>
chip_gen: v7x
topology: tpu7x:2x2x1
jax: 0.10.0
libtpu: 0.0.40
codegen_flags: <defaults>
</compile_context>

<pallas_src>
import jax
import jax.numpy as jnp
from jax import lax
from jax.experimental import pallas as pl
from jax.experimental.pallas import tpu as pltpu


def _attention_gate_kernel(g_ref, x_ref, w_ref, b_ref, out_ref):
    """One coarse-voxel tile, all 8 parity planes on the sublane axis.

    g_ref:   (Cg, 8, T)   gating activations (parity planes on sublanes, coarse voxels on lanes)
    x_ref:   (C,  T)      coarse-grid x (only feeds the parity-0 sublane)
    w_ref:   SMEM f32[Ci*Cg + 2*Ci*C]  packed  W_g | F1 | F2   (each row-major)
    b_ref:   SMEM f32[5*Ci + 1]        packed  bg | b1_even | b1_odd | b2 | psi_w | psi_b
    out_ref: (Ci, 8, T)
    """
    f32 = jnp.float32
    Ci, P, T = out_ref.shape
    Cg = g_ref.shape[0]
    C = x_ref.shape[0]

    # static offsets into the packed SMEM scalar vectors
    o_wg, o_f1 = 0, Ci * Cg
    o_f2 = o_f1 + Ci * C
    o_bg, o_b1e, o_b1o, o_b2, o_psi, o_bpsi = 0, Ci, 2 * Ci, 3 * Ci, 4 * Ci, 5 * Ci

    gv = g_ref[...].astype(f32)                     # (Cg, 8, T)
    xv = x_ref[...].astype(f32)                     # (C, T)
    g_tiles = [gv[i] for i in range(Cg)]            # Cg x (8, T) — outer-dim picks, no shuffles
    x_rows = [xv[i:i + 1, :] for i in range(C)]     # C  x (1, T)

    # parity sublane 0 <=> (d, h, w) all even <=> x-dependent terms are active
    par = lax.broadcasted_iota(jnp.int32, (P, T), 0)
    on_coarse = par == 0                            # (8, T) bool

    # ---- pass 1: psi = sigmoid(psi_w . relu(g1 + x1) + psi_b) ----
    z = None
    for o in range(Ci):
        g1 = b_ref[o_bg + o] + w_ref[o_wg + o * Cg] * g_tiles[0]
        for i in range(1, Cg):
            g1 = g1 + w_ref[o_wg + o * Cg + i] * g_tiles[i]          # (8, T)
        xm1 = w_ref[o_f1 + o * C] * x_rows[0]
        for i in range(1, C):
            xm1 = xm1 + w_ref[o_f1 + o * C + i] * x_rows[i]          # (1, T)
        x1 = jnp.where(on_coarse, xm1 + b_ref[o_b1e + o], b_ref[o_b1o + o])
        p = jnp.maximum(g1 + x1, 0.0)                                # relu
        zo = b_ref[o_psi + o] * p
        z = zo if z is None else z + zo
    psi = jax.nn.sigmoid(z + b_ref[o_bpsi])                          # (8, T), EUP path

    # ---- pass 2: out = x2 * psi ----
    for o in range(Ci):
        xm2 = w_ref[o_f2 + o * C] * x_rows[0]
        for i in range(1, C):
            xm2 = xm2 + w_ref[o_f2 + o * C + i] * x_rows[i]          # (1, T)
        x2 = jnp.where(on_coarse, xm2 + b_ref[o_b2 + o], b_ref[o_b2 + o])
        out_ref[o] = (x2 * psi).astype(out_ref.dtype)


def init_params(key, in_channels, gating_channels, inter_channels):
    """Deterministic synthetic parameters, PyTorch weight conventions:
    Conv3d weight (out, in) [kernel dims of size 1 dropped], ConvTranspose3d weight (in, out)."""
    ks = jax.random.split(key, 14)
    w = lambda k, s: (0.1 * jax.random.normal(k, s)).astype(jnp.float32)
    C, Cg, Ci = in_channels, gating_channels, inter_channels
    return dict(
        Wg_w=w(ks[0], (Ci, Cg)),  Wg_b=w(ks[1], (Ci,)),
        Wx_w=w(ks[2], (Ci, C)),   Wx_b=w(ks[3], (Ci,)),
        psi_w=w(ks[4], (1, Ci)),  psi_b=w(ks[5], (1,)),
        t1_w=w(ks[6], (Ci, Ci)),  t1_b=w(ks[7], (Ci,)),
        t2_w=w(ks[8], (Ci, Ci)),  t2_b=w(ks[9], (Ci,)),
        c1_w=w(ks[10], (Ci, Ci)), c1_b=w(ks[11], (Ci,)),
        c2_w=w(ks[12], (Ci, Ci)), c2_b=w(ks[13], (Ci,)),
    )


def attention_gate_3d(x, g, params, *, tile_m=32768,
                      stream_dtype=jnp.float32, out_dtype=jnp.float32):
    N, C, D, H, W = x.shape
    Ng, Cg, Dg, Hg, Wg_ = g.shape
    Do, Ho, Wo = 2 * D - 1, 2 * H - 1, 2 * W - 1
    assert (Ng, Dg, Hg, Wg_) == (N, Do, Ho, Wo), "gating grid must match tconv output grid"
    Ci = params["Wg_w"].shape[0]
    assert C == Ci, "forward applies tconv3d2 (inter->inter) to x => in_channels == inter_channels"

    f32 = jnp.float32
    wg_w, wg_b = params["Wg_w"].astype(f32), params["Wg_b"].astype(f32)
    wx_w, wx_b = params["Wx_w"].astype(f32), params["Wx_b"].astype(f32)
    t1_w, t1_b = params["t1_w"].astype(f32), params["t1_b"].astype(f32)
    c1_w, c1_b = params["c1_w"].astype(f32), params["c1_b"].astype(f32)
    t2_w, t2_b = params["t2_w"].astype(f32), params["t2_b"].astype(f32)
    c2_w, c2_b = params["c2_w"].astype(f32), params["c2_b"].astype(f32)
    psi_w, psi_b = params["psi_w"].astype(f32), params["psi_b"].astype(f32)

    # ---- algebraic fusion of the x-path 1x1x1 conv chains (tiny host-side matmuls) ----
    #   even voxel:  x1 = F1 @ x + b1_even,  x2 = F2 @ x + b2
    #   odd  voxel:  x1 = b1_odd,            x2 = b2
    F1 = c1_w @ t1_w.T @ wx_w
    b1_even = c1_w @ (t1_w.T @ wx_b + t1_b) + c1_b
    b1_odd = c1_w @ t1_b + c1_b
    F2 = c2_w @ t2_w.T
    b2 = c2_w @ t2_b + c2_b

    wvec = jnp.concatenate([wg_w.reshape(-1), F1.reshape(-1), F2.reshape(-1)]).astype(f32)
    bvec = jnp.concatenate([wg_b, b1_even, b1_odd, b2, psi_w[0], psi_b]).astype(f32)

    # ---- layout: parity (d%2,h%2,w%2) on sublanes, flattened coarse voxels on lanes ----
    # TODO(synk): fold these relayout passes (an extra HBM read+write of g and of the output)
    # into the producing/consuming ops of the surrounding network instead of materializing them.
    Mc = N * D * H * W
    mc128 = ((Mc + 127) // 128) * 128
    tile_m = max(128, (min(int(tile_m), mc128) // 128) * 128)
    num_tiles = (Mc + tile_m - 1) // tile_m
    Mc_pad = num_tiles * tile_m

    # g: (N, Cg, Do, Ho, Wo) -> pad fine grid to (2D, 2H, 2W) -> (Cg, parity, coarse-flat)
    g_pad = jnp.pad(g, ((0, 0), (0, 0), (0, 2 * D - Do), (0, 2 * H - Ho), (0, 2 * W - Wo)))
    g_pl = g_pad.reshape(N, Cg, D, 2, H, 2, W, 2)
    g_pl = jnp.transpose(g_pl, (1, 3, 5, 7, 0, 2, 4, 6)).reshape(Cg, 8, Mc)
    g_pl = jnp.pad(g_pl, ((0, 0), (0, 0), (0, Mc_pad - Mc))).astype(stream_dtype)

    # x: coarse grid only, channels-first (streamed once; 1/8 of the fine-grid bytes)
    x_cf = jnp.transpose(x, (1, 0, 2, 3, 4)).reshape(C, Mc)
    x_cf = jnp.pad(x_cf, ((0, 0), (0, Mc_pad - Mc))).astype(stream_dtype)

    # 1-D grid over coarse tiles; for realistic volumes this has many steps (megacore on v7x).
    # If v5e xprof shows exposed DMA, add pipeline_mode=pl.Buffered(3) to the g/out specs.
    grid = (num_tiles,)
    out_planes = pl.pallas_call(
        _attention_gate_kernel,
        out_shape=jax.ShapeDtypeStruct((Ci, 8, Mc_pad), out_dtype),
        grid=grid,
        in_specs=[
            pl.BlockSpec((Cg, 8, tile_m), lambda t: (0, 0, t)),        # g tile (sublane-dense)
            pl.BlockSpec((C, tile_m), lambda t: (0, t)),               # coarse x tile
            pl.BlockSpec(memory_space=pltpu.MemorySpace.SMEM),         # packed fused weights
            pl.BlockSpec(memory_space=pltpu.MemorySpace.SMEM),         # packed biases / psi
        ],
        out_specs=pl.BlockSpec((Ci, 8, tile_m), lambda t: (0, 0, t)),
        compiler_params=pltpu.CompilerParams(
            dimension_semantics=("parallel",),
            vmem_limit_bytes=48 * 1024 * 1024,   # headroom under v7x's 64 MiB physical VMEM
        ),
    )(g_pl, x_cf, wvec, bvec)

    # ---- back to NCDHW on the (2D-1, 2H-1, 2W-1) grid ----
    out = out_planes[:, :, :Mc].reshape(Ci, 2, 2, 2, N, D, H, W)
    out = jnp.transpose(out, (4, 0, 5, 1, 6, 2, 7, 3)).reshape(N, Ci, 2 * D, 2 * H, 2 * W)
    return out[:, :, :Do, :Ho, :Wo]


def reference(x, g, params):
    """Pure-JAX replica of the PyTorch forward (NCDHW), for verification."""
    def conv1x1(v, w, b):      # Conv3d, weight (out, in)
        return jnp.einsum('oc,ncdhw->nodhw', w, v) + b[None, :, None, None, None]

    def tconv1x1_s2(v, w, b):  # ConvTranspose3d k=1 s=2 p=0, weight (in, out)
        N, C, D, H, W = v.shape
        y = jnp.einsum('co,ncdhw->nodhw', w, v)
        out = jnp.zeros((N, w.shape[1], 2 * D - 1, 2 * H - 1, 2 * W - 1), v.dtype)
        out = out.at[:, :, ::2, ::2, ::2].set(y)
        return out + b[None, :, None, None, None]

    g1 = conv1x1(g, params["Wg_w"], params["Wg_b"])
    x1 = conv1x1(x, params["Wx_w"], params["Wx_b"])
    x1 = tconv1x1_s2(x1, params["t1_w"], params["t1_b"])
    x1 = conv1x1(x1, params["c1_w"], params["c1_b"])
    psi = jax.nn.relu(g1 + x1)
    psi = jax.nn.sigmoid(conv1x1(psi, params["psi_w"], params["psi_b"]))
    x2 = tconv1x1_s2(x, params["t2_w"], params["t2_b"])
    x2 = conv1x1(x2, params["c2_w"], params["c2_b"])
    return x2 * psi


if __name__ == "__main__":
    key = jax.random.PRNGKey(0)
    k_params, kx, kg = jax.random.split(key, 3)

    N = 2
    in_channels = inter_channels = 4   # must be equal (see forward of the PyTorch module)
    gating_channels = 4
    D, H, W = 7, 8, 8                  # non-cubic to exercise the parity/padding paths
    Do, Ho, Wo = 2 * D - 1, 2 * H - 1, 2 * W - 1

    params = init_params(k_params, in_channels, gating_channels, inter_channels)
    x = jax.random.normal(kx, (N, in_channels, D, H, W), dtype=jnp.float32)
    g = jax.random.normal(kg, (N, gating_channels, Do, Ho, Wo), dtype=jnp.float32)

    ref = reference(x, g, params)

    # f32 streaming (default): matches the PyTorch module's numerics
    out = attention_gate_3d(x, g, params)
    out = jax.block_until_ready(out)
    assert out.shape == ref.shape == (N, inter_channels, Do, Ho, Wo)
    assert jnp.allclose(out, ref, atol=1e-4, rtol=1e-4), float(jnp.max(jnp.abs(out - ref)))

    # bf16 streaming of g/x AND the output (v5e bandwidth mode) + small tile to exercise the
    # multi-tile grid and lane-padding paths.  Math stays f32.
    out_bf16 = attention_gate_3d(x, g, params, tile_m=256,
                                 stream_dtype=jnp.bfloat16, out_dtype=jnp.bfloat16)
    out_bf16 = jax.block_until_ready(out_bf16).astype(jnp.float32)
    assert jnp.allclose(out_bf16, ref, atol=5e-2, rtol=5e-2), \
        float(jnp.max(jnp.abs(out_bf16 - ref)))

    print("KERNEL_OK")
</pallas_src>

<mosaic_0001>
module attributes {stable_mosaic.version = 11 : i64} {
  func.func @_attention_gate_kernel(%arg0: i32, %arg1: memref<4x8x896xf32, #tpu.memory_space<vmem>>, %arg2: memref<4x896xf32, #tpu.memory_space<vmem>>, %arg3: memref<48xf32, #tpu.memory_space<smem>>, %arg4: memref<21xf32, #tpu.memory_space<smem>>, %arg5: memref<4x8x896xf32, #tpu.memory_space<vmem>>) attributes {dimension_semantics = [#tpu.dimension_semantics<parallel>], iteration_bounds = array<i64: 1>, scalar_prefetch = 0 : i64, scratch_operands = 0 : i64, tpu.core_type = #tpu.core_type<tc>, window_params = [{transform_indices = @transform_0, window_bounds = array<i64: 4, 8, 896>}, {transform_indices = @transform_1, window_bounds = array<i64: 4, 896>}, {transform_indices = @transform_2, window_bounds = array<i64: 48>}, {transform_indices = @transform_3, window_bounds = array<i64: 21>}, {transform_indices = @transform_4, window_bounds = array<i64: 4, 8, 896>}]} {
    %c0 = arith.constant 0 : index
    %c0_0 = arith.constant 0 : index
    %c0_1 = arith.constant 0 : index
    %0 = vector.load %arg1[%c0, %c0_0, %c0_1] : memref<4x8x896xf32, #tpu.memory_space<vmem>>, vector<4x8x896xf32>
    %c0_2 = arith.constant 0 : index
    %c0_3 = arith.constant 0 : index
    %1 = vector.load %arg2[%c0_2, %c0_3] : memref<4x896xf32, #tpu.memory_space<vmem>>, vector<4x896xf32>
    %2 = vector.extract_strided_slice %0 {offsets = [0, 0, 0], sizes = [1, 8, 896], strides = [1, 1, 1]} : vector<4x8x896xf32> to vector<1x8x896xf32>
    %3 = vector.shape_cast %2 : vector<1x8x896xf32> to vector<8x896xf32>
    %4 = vector.extract_strided_slice %0 {offsets = [1, 0, 0], sizes = [1, 8, 896], strides = [1, 1, 1]} : vector<4x8x896xf32> to vector<1x8x896xf32>
    %5 = vector.shape_cast %4 : vector<1x8x896xf32> to vector<8x896xf32>
    %6 = vector.extract_strided_slice %0 {offsets = [2, 0, 0], sizes = [1, 8, 896], strides = [1, 1, 1]} : vector<4x8x896xf32> to vector<1x8x896xf32>
    %7 = vector.shape_cast %6 : vector<1x8x896xf32> to vector<8x896xf32>
    %8 = vector.extract_strided_slice %0 {offsets = [3, 0, 0], sizes = [1, 8, 896], strides = [1, 1, 1]} : vector<4x8x896xf32> to vector<1x8x896xf32>
    %9 = vector.shape_cast %8 : vector<1x8x896xf32> to vector<8x896xf32>
    %10 = vector.extract_strided_slice %1 {offsets = [0, 0], sizes = [1, 896], strides = [1, 1]} : vector<4x896xf32> to vector<1x896xf32>
    %11 = vector.extract_strided_slice %1 {offsets = [1, 0], sizes = [1, 896], strides = [1, 1]} : vector<4x896xf32> to vector<1x896xf32>
    %12 = vector.extract_strided_slice %1 {offsets = [2, 0], sizes = [1, 896], strides = [1, 1]} : vector<4x896xf32> to vector<1x896xf32>
    %13 = vector.extract_strided_slice %1 {offsets = [3, 0], sizes = [1, 896], strides = [1, 1]} : vector<4x896xf32> to vector<1x896xf32>
    %14 = tpu.iota {dimensions = array<i32: 0>} : vector<8x896xi32>
    %c0_i32 = arith.constant 0 : i32
    %15 = vector.broadcast %c0_i32 : i32 to vector<8x896xi32>
    %16 = arith.cmpi eq, %14, %15 : vector<8x896xi32>
    %c0_4 = arith.constant 0 : index
    %17 = memref.load %arg4[%c0_4] : memref<21xf32, #tpu.memory_space<smem>>
    %c0_5 = arith.constant 0 : index
    %18 = memref.load %arg3[%c0_5] : memref<48xf32, #tpu.memory_space<smem>>
    %19 = vector.broadcast %18 : f32 to vector<8x896xf32>
    %20 = arith.mulf %19, %3 : vector<8x896xf32>
    %21 = vector.broadcast %17 : f32 to vector<8x896xf32>
    %22 = arith.addf %21, %20 : vector<8x896xf32>
    %c1 = arith.constant 1 : index
    %23 = memref.load %arg3[%c1] : memref<48xf32, #tpu.memory_space<smem>>
    %24 = vector.broadcast %23 : f32 to vector<8x896xf32>
    %25 = arith.mulf %24, %5 : vector<8x896xf32>
    %26 = arith.addf %22, %25 : vector<8x896xf32>
    %c2 = arith.constant 2 : index
    %27 = memref.load %arg3[%c2] : memref<48xf32, #tpu.memory_space<smem>>
    %28 = vector.broadcast %27 : f32 to vector<8x896xf32>
    %29 = arith.mulf %28, %7 : vector<8x896xf32>
    %30 = arith.addf %26, %29 : vector<8x896xf32>
    %c3 = arith.constant 3 : index
    %31 = memref.load %arg3[%c3] : memref<48xf32, #tpu.memory_space<smem>>
    %32 = vector.broadcast %31 : f32 to vector<8x896xf32>
    %33 = arith.mulf %32, %9 : vector<8x896xf32>
    %34 = arith.addf %30, %33 : vector<8x896xf32>
    %c16 = arith.constant 16 : index
    %35 = memref.load %arg3[%c16] : memref<48xf32, #tpu.memory_space<smem>>
    %36 = vector.broadcast %35 : f32 to vector<1x896xf32>
    %37 = arith.mulf %36, %10 : vector<1x896xf32>
    %c17 = arith.constant 17 : index
    %38 = memref.load %arg3[%c17] : memref<48xf32, #tpu.memory_space<smem>>
    %39 = vector.broadcast %38 : f32 to vector<1x896xf32>
    %40 = arith.mulf %39, %11 : vector<1x896xf32>
    %41 = arith.addf %37, %40 : vector<1x896xf32>
    %c18 = arith.constant 18 : index
    %42 = memref.load %arg3[%c18] : memref<48xf32, #tpu.memory_space<smem>>
    %43 = vector.broadcast %42 : f32 to vector<1x896xf32>
    %44 = arith.mulf %43, %12 : vector<1x896xf32>
    %45 = arith.addf %41, %44 : vector<1x896xf32>
    %c19 = arith.constant 19 : index
    %46 = memref.load %arg3[%c19] : memref<48xf32, #tpu.memory_space<smem>>
    %47 = vector.broadcast %46 : f32 to vector<1x896xf32>
    %48 = arith.mulf %47, %13 : vector<1x896xf32>
    %49 = arith.addf %45, %48 : vector<1x896xf32>
    %c4 = arith.constant 4 : index
    %50 = memref.load %arg4[%c4] : memref<21xf32, #tpu.memory_space<smem>>
    %51 = vector.broadcast %50 : f32 to vector<1x896xf32>
    %52 = arith.addf %49, %51 : vector<1x896xf32>
    %c8 = arith.constant 8 : index
    %53 = memref.load %arg4[%c8] : memref<21xf32, #tpu.memory_space<smem>>
    %54 = vector.shape_cast %52 : vector<1x896xf32> to vector<1x896xf32>
    %55 = vector.broadcast %54 : vector<1x896xf32> to vector<8x896xf32>
    %56 = vector.broadcast %53 : f32 to vector<8x896xf32>
    %57 = arith.select %16, %55, %56 : vector<8x896xi1>, vector<8x896xf32>
    %58 = arith.addf %34, %57 : vector<8x896xf32>
    %cst = arith.constant 0.000000e+00 : f32
    %59 = vector.broadcast %cst : f32 to vector<8x896xf32>
    %60 = arith.maximumf %58, %59 : vector<8x896xf32>
    %c16_6 = arith.constant 16 : index
    %61 = memref.load %arg4[%c16_6] : memref<21xf32, #tpu.memory_space<smem>>
    %62 = vector.broadcast %61 : f32 to vector<8x896xf32>
    %63 = arith.mulf %62, %60 : vector<8x896xf32>
    %c1_7 = arith.constant 1 : index
    %64 = memref.load %arg4[%c1_7] : memref<21xf32, #tpu.memory_space<smem>>
    %c4_8 = arith.constant 4 : index
    %65 = memref.load %arg3[%c4_8] : memref<48xf32, #tpu.memory_space<smem>>
    %66 = vector.broadcast %65 : f32 to vector<8x896xf32>
    %67 = arith.mulf %66, %3 : vector<8x896xf32>
    %68 = vector.broadcast %64 : f32 to vector<8x896xf32>
    %69 = arith.addf %68, %67 : vector<8x896xf32>
    %c5 = arith.constant 5 : index
    %70 = memref.load %arg3[%c5] : memref<48xf32, #tpu.memory_space<smem>>
    %71 = vector.broadcast %70 : f32 to vector<8x896xf32>
    %72 = arith.mulf %71, %5 : vector<8x896xf32>
    %73 = arith.addf %69, %72 : vector<8x896xf32>
    %c6 = arith.constant 6 : index
    %74 = memref.load %arg3[%c6] : memref<48xf32, #tpu.memory_space<smem>>
    %75 = vector.broadcast %74 : f32 to vector<8x896xf32>
    %76 = arith.mulf %75, %7 : vector<8x896xf32>
    %77 = arith.addf %73, %76 : vector<8x896xf32>
    %c7 = arith.constant 7 : index
    %78 = memref.load %arg3[%c7] : memref<48xf32, #tpu.memory_space<smem>>
    %79 = vector.broadcast %78 : f32 to vector<8x896xf32>
    %80 = arith.mulf %79, %9 : vector<8x896xf32>
    %81 = arith.addf %77, %80 : vector<8x896xf32>
    %c20 = arith.constant 20 : index
    %82 = memref.load %arg3[%c20] : memref<48xf32, #tpu.memory_space<smem>>
    %83 = vector.broadcast %82 : f32 to vector<1x896xf32>
    %84 = arith.mulf %83, %10 : vector<1x896xf32>
    %c21 = arith.constant 21 : index
    %85 = memref.load %arg3[%c21] : memref<48xf32, #tpu.memory_space<smem>>
    %86 = vector.broadcast %85 : f32 to vector<1x896xf32>
    %87 = arith.mulf %86, %11 : vector<1x896xf32>
    %88 = arith.addf %84, %87 : vector<1x896xf32>
    %c22 = arith.constant 22 : index
    %89 = memref.load %arg3[%c22] : memref<48xf32, #tpu.memory_space<smem>>
    %90 = vector.broadcast %89 : f32 to vector<1x896xf32>
    %91 = arith.mulf %90, %12 : vector<1x896xf32>
    %92 = arith.addf %88, %91 : vector<1x896xf32>
    %c23 = arith.constant 23 : index
    %93 = memref.load %arg3[%c23] : memref<48xf32, #tpu.memory_space<smem>>
    %94 = vector.broadcast %93 : f32 to vector<1x896xf32>
    %95 = arith.mulf %94, %13 : vector<1x896xf32>
    %96 = arith.addf %92, %95 : vector<1x896xf32>
    %c5_9 = arith.constant 5 : index
    %97 = memref.load %arg4[%c5_9] : memref<21xf32, #tpu.memory_space<smem>>
    %98 = vector.broadcast %97 : f32 to vector<1x896xf32>
    %99 = arith.addf %96, %98 : vector<1x896xf32>
    %c9 = arith.constant 9 : index
    %100 = memref.load %arg4[%c9] : memref<21xf32, #tpu.memory_space<smem>>
    %101 = vector.shape_cast %99 : vector<1x896xf32> to vector<1x896xf32>
    %102 = vector.broadcast %101 : vector<1x896xf32> to vector<8x896xf32>
    %103 = vector.broadcast %100 : f32 to vector<8x896xf32>
    %104 = arith.select %16, %102, %103 : vector<8x896xi1>, vector<8x896xf32>
    %105 = arith.addf %81, %104 : vector<8x896xf32>
    %cst_10 = arith.constant 0.000000e+00 : f32
    %106 = vector.broadcast %cst_10 : f32 to vector<8x896xf32>
    %107 = arith.maximumf %105, %106 : vector<8x896xf32>
    %c17_11 = arith.constant 17 : index
    %108 = memref.load %arg4[%c17_11] : memref<21xf32, #tpu.memory_space<smem>>
    %109 = vector.broadcast %108 : f32 to vector<8x896xf32>
    %110 = arith.mulf %109, %107 : vector<8x896xf32>
    %111 = arith.addf %63, %110 : vector<8x896xf32>
    %c2_12 = arith.constant 2 : index
    %112 = memref.load %arg4[%c2_12] : memref<21xf32, #tpu.memory_space<smem>>
    %c8_13 = arith.constant 8 : index
    %113 = memref.load %arg3[%c8_13] : memref<48xf32, #tpu.memory_space<smem>>
    %114 = vector.broadcast %113 : f32 to vector<8x896xf32>
    %115 = arith.mulf %114, %3 : vector<8x896xf32>
    %116 = vector.broadcast %112 : f32 to vector<8x896xf32>
    %117 = arith.addf %116, %115 : vector<8x896xf32>
    %c9_14 = arith.constant 9 : index
    %118 = memref.load %arg3[%c9_14] : memref<48xf32, #tpu.memory_space<smem>>
    %119 = vector.broadcast %118 : f32 to vector<8x896xf32>
    %120 = arith.mulf %119, %5 : vector<8x896xf32>
    %121 = arith.addf %117, %120 : vector<8x896xf32>
    %c10 = arith.constant 10 : index
    %122 = memref.load %arg3[%c10] : memref<48xf32, #tpu.memory_space<smem>>
    %123 = vector.broadcast %122 : f32 to vector<8x896xf32>
    %124 = arith.mulf %123, %7 : vector<8x896xf32>
    %125 = arith.addf %121, %124 : vector<8x896xf32>
    %c11 = arith.constant 11 : index
    %126 = memref.load %arg3[%c11] : memref<48xf32, #tpu.memory_space<smem>>
    %127 = vector.broadcast %126 : f32 to vector<8x896xf32>
    %128 = arith.mulf %127, %9 : vector<8x896xf32>
    %129 = arith.addf %125, %128 : vector<8x896xf32>
    %c24 = arith.constant 24 : index
    %130 = memref.load %arg3[%c24] : memref<48xf32, #tpu.memory_space<smem>>
    %131 = vector.broadcast %130 : f32 to vector<1x896xf32>
    %132 = arith.mulf %131, %10 : vector<1x896xf32>
    %c25 = arith.constant 25 : index
    %133 = memref.load %arg3[%c25] : memref<48xf32, #tpu.memory_space<smem>>
    %134 = vector.broadcast %133 : f32 to vector<1x896xf32>
    %135 = arith.mulf %134, %11 : vector<1x896xf32>
    %136 = arith.addf %132, %135 : vector<1x896xf32>
    %c26 = arith.constant 26 : index
    %137 = memref.load %arg3[%c26] : memref<48xf32, #tpu.memory_space<smem>>
    %138 = vector.broadcast %137 : f32 to vector<1x896xf32>
    %139 = arith.mulf %138, %12 : vector<1x896xf32>
    %140 = arith.addf %136, %139 : vector<1x896xf32>
    %c27 = arith.constant 27 : index
    %141 = memref.load %arg3[%c27] : memref<48xf32, #tpu.memory_space<smem>>
    %142 = vector.broadcast %141 : f32 to vector<1x896xf32>
    %143 = arith.mulf %142, %13 : vector<1x896xf32>
    %144 = arith.addf %140, %143 : vector<1x896xf32>
    %c6_15 = arith.constant 6 : index
    %145 = memref.load %arg4[%c6_15] : memref<21xf32, #tpu.memory_space<smem>>
    %146 = vector.broadcast %145 : f32 to vector<1x896xf32>
    %147 = arith.addf %144, %146 : vector<1x896xf32>
    %c10_16 = arith.constant 10 : index
    %148 = memref.load %arg4[%c10_16] : memref<21xf32, #tpu.memory_space<smem>>
    %149 = vector.shape_cast %147 : vector<1x896xf32> to vector<1x896xf32>
    %150 = vector.broadcast %149 : vector<1x896xf32> to vector<8x896xf32>
    %151 = vector.broadcast %148 : f32 to vector<8x896xf32>
    %152 = arith.select %16, %150, %151 : vector<8x896xi1>, vector<8x896xf32>
    %153 = arith.addf %129, %152 : vector<8x896xf32>
    %cst_17 = arith.constant 0.000000e+00 : f32
    %154 = vector.broadcast %cst_17 : f32 to vector<8x896xf32>
    %155 = arith.maximumf %153, %154 : vector<8x896xf32>
    %c18_18 = arith.constant 18 : index
    %156 = memref.load %arg4[%c18_18] : memref<21xf32, #tpu.memory_space<smem>>
    %157 = vector.broadcast %156 : f32 to vector<8x896xf32>
    %158 = arith.mulf %157, %155 : vector<8x896xf32>
    %159 = arith.addf %111, %158 : vector<8x896xf32>
    %c3_19 = arith.constant 3 : index
    %160 = memref.load %arg4[%c3_19] : memref<21xf32, #tpu.memory_space<smem>>
    %c12 = arith.constant 12 : index
    %161 = memref.load %arg3[%c12] : memref<48xf32, #tpu.memory_space<smem>>
    %162 = vector.broadcast %161 : f32 to vector<8x896xf32>
    %163 = arith.mulf %162, %3 : vector<8x896xf32>
    %164 = vector.broadcast %160 : f32 to vector<8x896xf32>
    %165 = arith.addf %164, %163 : vector<8x896xf32>
    %c13 = arith.constant 13 : index
    %166 = memref.load %arg3[%c13] : memref<48xf32, #tpu.memory_space<smem>>
    %167 = vector.broadcast %166 : f32 to vector<8x896xf32>
    %168 = arith.mulf %167, %5 : vector<8x896xf32>
    %169 = arith.addf %165, %168 : vector<8x896xf32>
    %c14 = arith.constant 14 : index
    %170 = memref.load %arg3[%c14] : memref<48xf32, #tpu.memory_space<smem>>
    %171 = vector.broadcast %170 : f32 to vector<8x896xf32>
    %172 = arith.mulf %171, %7 : vector<8x896xf32>
    %173 = arith.addf %169, %172 : vector<8x896xf32>
    %c15 = arith.constant 15 : index
    %174 = memref.load %arg3[%c15] : memref<48xf32, #tpu.memory_space<smem>>
    %175 = vector.broadcast %174 : f32 to vector<8x896xf32>
    %176 = arith.mulf %175, %9 : vector<8x896xf32>
    %177 = arith.addf %173, %176 : vector<8x896xf32>
    %c28 = arith.constant 28 : index
    %178 = memref.load %arg3[%c28] : memref<48xf32, #tpu.memory_space<smem>>
    %179 = vector.broadcast %178 : f32 to vector<1x896xf32>
    %180 = arith.mulf %179, %10 : vector<1x896xf32>
    %c29 = arith.constant 29 : index
    %181 = memref.load %arg3[%c29] : memref<48xf32, #tpu.memory_space<smem>>
    %182 = vector.broadcast %181 : f32 to vector<1x896xf32>
    %183 = arith.mulf %182, %11 : vector<1x896xf32>
    %184 = arith.addf %180, %183 : vector<1x896xf32>
    %c30 = arith.constant 30 : index
    %185 = memref.load %arg3[%c30] : memref<48xf32, #tpu.memory_space<smem>>
    %186 = vector.broadcast %185 : f32 to vector<1x896xf32>
    %187 = arith.mulf %186, %12 : vector<1x896xf32>
    %188 = arith.addf %184, %187 : vector<1x896xf32>
    %c31 = arith.constant 31 : index
    %189 = memref.load %arg3[%c31] : memref<48xf32, #tpu.memory_space<smem>>
    %190 = vector.broadcast %189 : f32 to vector<1x896xf32>
    %191 = arith.mulf %190, %13 : vector<1x896xf32>
    %192 = arith.addf %188, %191 : vector<1x896xf32>
    %c7_20 = arith.constant 7 : index
    %193 = memref.load %arg4[%c7_20] : memref<21xf32, #tpu.memory_space<smem>>
    %194 = vector.broadcast %193 : f32 to vector<1x896xf32>
    %195 = arith.addf %192, %194 : vector<1x896xf32>
    %c11_21 = arith.constant 11 : index
    %196 = memref.load %arg4[%c11_21] : memref<21xf32, #tpu.memory_space<smem>>
    %197 = vector.shape_cast %195 : vector<1x896xf32> to vector<1x896xf32>
    %198 = vector.broadcast %197 : vector<1x896xf32> to vector<8x896xf32>
    %199 = vector.broadcast %196 : f32 to vector<8x896xf32>
    %200 = arith.select %16, %198, %199 : vector<8x896xi1>, vector<8x896xf32>
    %201 = arith.addf %177, %200 : vector<8x896xf32>
    %cst_22 = arith.constant 0.000000e+00 : f32
    %202 = vector.broadcast %cst_22 : f32 to vector<8x896xf32>
    %203 = arith.maximumf %201, %202 : vector<8x896xf32>
    %c19_23 = arith.constant 19 : index
    %204 = memref.load %arg4[%c19_23] : memref<21xf32, #tpu.memory_space<smem>>
    %205 = vector.broadcast %204 : f32 to vector<8x896xf32>
    %206 = arith.mulf %205, %203 : vector<8x896xf32>
    %207 = arith.addf %159, %206 : vector<8x896xf32>
    %c20_24 = arith.constant 20 : index
    %208 = memref.load %arg4[%c20_24] : memref<21xf32, #tpu.memory_space<smem>>
    %209 = vector.broadcast %208 : f32 to vector<8x896xf32>
    %210 = arith.addf %207, %209 : vector<8x896xf32>
    %211 = arith.negf %210 : vector<8x896xf32>
    %212 = math.exp %211 : vector<8x896xf32>
    %cst_25 = arith.constant 1.000000e+00 : f32
    %213 = vector.broadcast %cst_25 : f32 to vector<8x896xf32>
    %214 = arith.addf %213, %212 : vector<8x896xf32>
    %215 = arith.divf %213, %214 : vector<8x896xf32>
    %c32 = arith.constant 32 : index
    %216 = memref.load %arg3[%c32] : memref<48xf32, #tpu.memory_space<smem>>
    %217 = vector.broadcast %216 : f32 to vector<1x896xf32>
    %218 = arith.mulf %217, %10 : vector<1x896xf32>
    %c33 = arith.constant 33 : index
    %219 = memref.load %arg3[%c33] : memref<48xf32, #tpu.memory_space<smem>>
    %220 = vector.broadcast %219 : f32 to vector<1x896xf32>
    %221 = arith.mulf %220, %11 : vector<1x896xf32>
    %222 = arith.addf %218, %221 : vector<1x896xf32>
    %c34 = arith.constant 34 : index
    %223 = memref.load %arg3[%c34] : memref<48xf32, #tpu.memory_space<smem>>
    %224 = vector.broadcast %223 : f32 to vector<1x896xf32>
    %225 = arith.mulf %224, %12 : vector<1x896xf32>
    %226 = arith.addf %222, %225 : vector<1x896xf32>
    %c35 = arith.constant 35 : index
    %227 = memref.load %arg3[%c35] : memref<48xf32, #tpu.memory_space<smem>>
    %228 = vector.broadcast %227 : f32 to vector<1x896xf32>
    %229 = arith.mulf %228, %13 : vector<1x896xf32>
    %230 = arith.addf %226, %229 : vector<1x896xf32>
    %c12_26 = arith.constant 12 : index
    %231 = memref.load %arg4[%c12_26] : memref<21xf32, #tpu.memory_space<smem>>
    %232 = vector.broadcast %231 : f32 to vector<1x896xf32>
    %233 = arith.addf %230, %232 : vector<1x896xf32>
    %c12_27 = arith.constant 12 : index
    %234 = memref.load %arg4[%c12_27] : memref<21xf32, #tpu.memory_space<smem>>
    %235 = vector.shape_cast %233 : vector<1x896xf32> to vector<1x896xf32>
    %236 = vector.broadcast %235 : vector<1x896xf32> to vector<8x896xf32>
    %237 = vector.broadcast %234 : f32 to vector<8x896xf32>
    %238 = arith.select %16, %236, %237 : vector<8x896xi1>, vector<8x896xf32>
    %239 = arith.mulf %238, %215 : vector<8x896xf32>
    %c0_28 = arith.constant 0 : index
    %c0_29 = arith.constant 0 : index
    %c0_30 = arith.constant 0 : index
    %240 = vector.load %arg5[%c0_28, %c0_29, %c0_30] : memref<4x8x896xf32, #tpu.memory_space<vmem>>, vector<1x8x896xf32>
    %241 = vector.shape_cast %240 : vector<1x8x896xf32> to vector<8x896xf32>
    %242 = vector.shape_cast %239 : vector<8x896xf32> to vector<1x8x896xf32>
    tpu.vector_store %arg5[%c0_28, %c0_29, %c0_30], %242 {strides = array<i32>} : memref<4x8x896xf32, #tpu.memory_space<vmem>>, vector<1x8x896xf32>,
    %c36 = arith.constant 36 : index
    %243 = memref.load %arg3[%c36] : memref<48xf32, #tpu.memory_space<smem>>
    %244 = vector.broadcast %243 : f32 to vector<1x896xf32>
    %245 = arith.mulf %244, %10 : vector<1x896xf32>
    %c37 = arith.constant 37 : index
    %246 = memref.load %arg3[%c37] : memref<48xf32, #tpu.memory_space<smem>>
    %247 = vector.broadcast %246 : f32 to vector<1x896xf32>
    %248 = arith.mulf %247, %11 : vector<1x896xf32>
    %249 = arith.addf %245, %248 : vector<1x896xf32>
    %c38 = arith.constant 38 : index
    %250 = memref.load %arg3[%c38] : memref<48xf32, #tpu.memory_space<smem>>
    %251 = vector.broadcast %250 : f32 to vector<1x896xf32>
    %252 = arith.mulf %251, %12 : vector<1x896xf32>
    %253 = arith.addf %249, %252 : vector<1x896xf32>
    %c39 = arith.constant 39 : index
    %254 = memref.load %arg3[%c39] : memref<48xf32, #tpu.memory_space<smem>>
    %255 = vector.broadcast %254 : f32 to vector<1x896xf32>
    %256 = arith.mulf %255, %13 : vector<1x896xf32>
    %257 = arith.addf %253, %256 : vector<1x896xf32>
    %c13_31 = arith.constant 13 : index
    %258 = memref.load %arg4[%c13_31] : memref<21xf32, #tpu.memory_space<smem>>
    %259 = vector.broadcast %258 : f32 to vector<1x896xf32>
    %260 = arith.addf %257, %259 : vector<1x896xf32>
    %c13_32 = arith.constant 13 : index
    %261 = memref.load %arg4[%c13_32] : memref<21xf32, #tpu.memory_space<smem>>
    %262 = vector.shape_cast %260 : vector<1x896xf32> to vector<1x896xf32>
    %263 = vector.broadcast %262 : vector<1x896xf32> to vector<8x896xf32>
    %264 = vector.broadcast %261 : f32 to vector<8x896xf32>
    %265 = arith.select %16, %263, %264 : vector<8x896xi1>, vector<8x896xf32>
    %266 = arith.mulf %265, %215 : vector<8x896xf32>
    %c1_33 = arith.constant 1 : index
    %c0_34 = arith.constant 0 : index
    %c0_35 = arith.constant 0 : index
    %267 = vector.load %arg5[%c1_33, %c0_34, %c0_35] : memref<4x8x896xf32, #tpu.memory_space<vmem>>, vector<1x8x896xf32>
    %268 = vector.shape_cast %267 : vector<1x8x896xf32> to vector<8x896xf32>
    %269 = vector.shape_cast %266 : vector<8x896xf32> to vector<1x8x896xf32>
    tpu.vector_store %arg5[%c1_33, %c0_34, %c0_35], %269 {strides = array<i32>} : memref<4x8x896xf32, #tpu.memory_space<vmem>>, vector<1x8x896xf32>,
    %c40 = arith.constant 40 : index
    %270 = memref.load %arg3[%c40] : memref<48xf32, #tpu.memory_space<smem>>
    %271 = vector.broadcast %270 : f32 to vector<1x896xf32>
    %272 = arith.mulf %271, %10 : vector<1x896xf32>
    %c41 = arith.constant 41 : index
    %273 = memref.load %arg3[%c41] : memref<48xf32, #tpu.memory_space<smem>>
    %274 = vector.broadcast %273 : f32 to vector<1x896xf32>
    %275 = arith.mulf %274, %11 : vector<1x896xf32>
    %276 = arith.addf %272, %275 : vector<1x896xf32>
    %c42 = arith.constant 42 : index
    %277 = memref.load %arg3[%c42] : memref<48xf32, #tpu.memory_space<smem>>
    %278 = vector.broadcast %277 : f32 to vector<1x896xf32>
    %279 = arith.mulf %278, %12 : vector<1x896xf32>
    %280 = arith.addf %276, %279 : vector<1x896xf32>
    %c43 = arith.constant 43 : index
    %281 = memref.load %arg3[%c43] : memref<48xf32, #tpu.memory_space<smem>>
    %282 = vector.broadcast %281 : f32 to vector<1x896xf32>
    %283 = arith.mulf %282, %13 : vector<1x896xf32>
    %284 = arith.addf %280, %283 : vector<1x896xf32>
    %c14_36 = arith.constant 14 : index
    %285 = memref.load %arg4[%c14_36] : memref<21xf32, #tpu.memory_space<smem>>
    %286 = vector.broadcast %285 : f32 to vector<1x896xf32>
    %287 = arith.addf %284, %286 : vector<1x896xf32>
    %c14_37 = arith.constant 14 : index
    %288 = memref.load %arg4[%c14_37] : memref<21xf32, #tpu.memory_space<smem>>
    %289 = vector.shape_cast %287 : vector<1x896xf32> to vector<1x896xf32>
    %290 = vector.broadcast %289 : vector<1x896xf32> to vector<8x896xf32>
    %291 = vector.broadcast %288 : f32 to vector<8x896xf32>
    %292 = arith.select %16, %290, %291 : vector<8x896xi1>, vector<8x896xf32>
    %293 = arith.mulf %292, %215 : vector<8x896xf32>
    %c2_38 = arith.constant 2 : index
    %c0_39 = arith.constant 0 : index
    %c0_40 = arith.constant 0 : index
    %294 = vector.load %arg5[%c2_38, %c0_39, %c0_40] : memref<4x8x896xf32, #tpu.memory_space<vmem>>, vector<1x8x896xf32>
    %295 = vector.shape_cast %294 : vector<1x8x896xf32> to vector<8x896xf32>
    %296 = vector.shape_cast %293 : vector<8x896xf32> to vector<1x8x896xf32>
    tpu.vector_store %arg5[%c2_38, %c0_39, %c0_40], %296 {strides = array<i32>} : memref<4x8x896xf32, #tpu.memory_space<vmem>>, vector<1x8x896xf32>,
    %c44 = arith.constant 44 : index
    %297 = memref.load %arg3[%c44] : memref<48xf32, #tpu.memory_space<smem>>
    %298 = vector.broadcast %297 : f32 to vector<1x896xf32>
    %299 = arith.mulf %298, %10 : vector<1x896xf32>
    %c45 = arith.constant 45 : index
    %300 = memref.load %arg3[%c45] : memref<48xf32, #tpu.memory_space<smem>>
    %301 = vector.broadcast %300 : f32 to vector<1x896xf32>
    %302 = arith.mulf %301, %11 : vector<1x896xf32>
    %303 = arith.addf %299, %302 : vector<1x896xf32>
    %c46 = arith.constant 46 : index
    %304 = memref.load %arg3[%c46] : memref<48xf32, #tpu.memory_space<smem>>
    %305 = vector.broadcast %304 : f32 to vector<1x896xf32>
    %306 = arith.mulf %305, %12 : vector<1x896xf32>
    %307 = arith.addf %303, %306 : vector<1x896xf32>
    %c47 = arith.constant 47 : index
    %308 = memref.load %arg3[%c47] : memref<48xf32, #tpu.memory_space<smem>>
    %309 = vector.broadcast %308 : f32 to vector<1x896xf32>
    %310 = arith.mulf %309, %13 : vector<1x896xf32>
    %311 = arith.addf %307, %310 : vector<1x896xf32>
    %c15_41 = arith.constant 15 : index
    %312 = memref.load %arg4[%c15_41] : memref<21xf32, #tpu.memory_space<smem>>
    %313 = vector.broadcast %312 : f32 to vector<1x896xf32>
    %314 = arith.addf %311, %313 : vector<1x896xf32>
    %c15_42 = arith.constant 15 : index
    %315 = memref.load %arg4[%c15_42] : memref<21xf32, #tpu.memory_space<smem>>
    %316 = vector.shape_cast %314 : vector<1x896xf32> to vector<1x896xf32>
    %317 = vector.broadcast %316 : vector<1x896xf32> to vector<8x896xf32>
    %318 = vector.broadcast %315 : f32 to vector<8x896xf32>
    %319 = arith.select %16, %317, %318 : vector<8x896xi1>, vector<8x896xf32>
    %320 = arith.mulf %319, %215 : vector<8x896xf32>
    %c3_43 = arith.constant 3 : index
    %c0_44 = arith.constant 0 : index
    %c0_45 = arith.constant 0 : index
    %321 = vector.load %arg5[%c3_43, %c0_44, %c0_45] : memref<4x8x896xf32, #tpu.memory_space<vmem>>, vector<1x8x896xf32>
    %322 = vector.shape_cast %321 : vector<1x8x896xf32> to vector<8x896xf32>
    %323 = vector.shape_cast %320 : vector<8x896xf32> to vector<1x8x896xf32>
    tpu.vector_store %arg5[%c3_43, %c0_44, %c0_45], %323 {strides = array<i32>} : memref<4x8x896xf32, #tpu.memory_space<vmem>>, vector<1x8x896xf32>,
    return
  }
  func.func @transform_0(%arg0: i32) -> (i32, i32, i32) {
    %c0_i32 = arith.constant 0 : i32
    %c0_i32_0 = arith.constant 0 : i32
    %c0_i32_1 = arith.constant 0 : i32
    return %c0_i32, %c0_i32_0, %arg0 : i32, i32, i32
  }
  func.func @transform_1(%arg0: i32) -> (i32, i32) {
    %c0_i32 = arith.constant 0 : i32
    %c0_i32_0 = arith.constant 0 : i32
    return %c0_i32, %arg0 : i32, i32
  }
  func.func @transform_2(%arg0: i32) -> i32 {
    %c0_i32 = arith.constant 0 : i32
    %c0_i32_0 = arith.constant 0 : i32
    return %c0_i32 : i32
  }
  func.func @transform_3(%arg0: i32) -> i32 {
    %c0_i32 = arith.constant 0 : i32
    %c0_i32_0 = arith.constant 0 : i32
    return %c0_i32 : i32
  }
  func.func @transform_4(%arg0: i32) -> (i32, i32, i32) {
    %c0_i32 = arith.constant 0 : i32
    %c0_i32_0 = arith.constant 0 : i32
    %c0_i32_1 = arith.constant 0 : i32
    return %c0_i32, %c0_i32_0, %arg0 : i32, i32, i32
  }
}

</mosaic_0001>

<llo_original>
// kernel: tpu_custom_call.1
$region0: #{tpu_custom_call.1}
  #allocation0 [shape = 'u32[]', space=smem, size = 0x4, offset = 0x4, fixed_abs, tag = 'smem constant byte address 0x4 - core index']
  #allocation1 [shape = 'u32[144,128]{1,0:T(1,128)}', space=vmem, size = 0x12000, scoped, tag = 'internal scratch']
  %s0 = inlined_call_operand.hbm [shape: f32[4,8,896], index: 0, kind: input, shape index: {}]
  %s1 = inlined_call_operand.hbm [shape: f32[4,896], index: 1, kind: input, shape index: {}]
  %s2 = inlined_call_operand.vmem [shape: f32[48], index: 2, kind: input, shape index: {}]
  %s3 = inlined_call_operand.vmem [shape: f32[21], index: 3, kind: input, shape index: {}]
  %s4 = inlined_call_operand.hbm [shape: f32[4,8,896], index: 4, kind: output, shape index: {}]
  %s5 = sld [smem:[#allocation0]]
  $region42: #{tpu_custom_call.1} parent=0
    _
  %s7 = ssub.s32 1, %s5
  %s8 = scalar_select 0, %s7, %s5
  $region1: #{tpu_custom_call.1} parent=0
    #allocation2 [shape = 'u8[114688]{0}', space=vmem, size = 0x1c000, scoped, tag = 'input window, operand 0, single buffered']
    #allocation3 [shape = 's32[1]{0}', space=sflag, size = 0x4, scoped, tag = 'scoped memory for tpu_custom_call.1']
    #allocation4 [shape = 's32[1]{0}', space=sflag, size = 0x4, scoped, tag = 'scoped memory for tpu_custom_call.1']
    #allocation5 [shape = 's32[1]{0}', space=sflag, size = 0x4, scoped, tag = 'scoped memory for tpu_custom_call.1']
    #allocation6 [shape = 'u8[14336]{0}', space=vmem, size = 0x3800, scoped, tag = 'input window, operand 1, single buffered']
    #allocation7 [shape = 's32[1]{0}', space=sflag, size = 0x4, scoped, tag = 'scoped memory for tpu_custom_call.1']
    #allocation8 [shape = 'u8[512]{0}', space=smem, size = 0x200, scoped, tag = 'input window, operand 2, single buffered']
    #allocation9 [shape = 'u8[512]{0}', space=smem, size = 0x200, scoped, tag = 'input window, operand 3, single buffered']
    #allocation10 [shape = 's32[1]{0}', space=sflag, size = 0x4, scoped, tag = 'scoped memory for tpu_custom_call.1']
    #allocation11 [shape = 'u8[114688]{0}', space=vmem, size = 0x1c000, scoped, tag = 'output window, operand 0, single buffered']
    %9 = vsyncpa [#allocation3], 0
    %10 = vsyncpa [#allocation7], 0
    %11 = vsyncpa [#allocation5], 0
    %12 = vsyncpa [#allocation10], 0
    %13 = vsyncpa [#allocation4], 0
    // Predicated region
    $region2: #{tpu_custom_call.1} parent=1 // pred_check
      _
    $region3: #{tpu_custom_call.1} parent=1 // pred_check_branch
      %15 = sbr.rel (0) target = $region5
    $region4: #{tpu_custom_call.1} parent=1 // pred_region
      %s17 = ssub.s32 3584, 3584
      %18 = vsyncadd [#allocation3], %s17
      %s19 = sshll.u32 [#allocation2], 4
      %s20 = int_to_ptr.vmem [resolvable:$true] %s19
      %25 = dma.hbm_to_vmem [thread:$0]  %s0, 3584, %s20, [#allocation3], 896, 896, 56
    $region5: #{tpu_custom_call.1} parent=1 // pred_fallthru
      _
    // Predicated region
    $region6: #{tpu_custom_call.1} parent=1 // pred_check
      _
    $region7: #{tpu_custom_call.1} parent=1 // pred_check_branch
      %27 = sbr.rel (0) target = $region9
    $region8: #{tpu_custom_call.1} parent=1 // pred_region
      %s29 = ssub.s32 448, 448
      %30 = vsyncadd [#allocation7], %s29
      %s32 = sshll.u32 [#allocation6], 4
      %s33 = int_to_ptr.vmem [resolvable:$true] %s32
      %35 = dma.hbm_to_vmem [thread:$0]  %s1, 448, %s33, [#allocation7]
    $region9: #{tpu_custom_call.1} parent=1 // pred_fallthru
      _
    // Predicated region
    $region10: #{tpu_custom_call.1} parent=1 // pred_check
      _
    $region11: #{tpu_custom_call.1} parent=1 // pred_check_branch
      %37 = sbr.rel (0) target = $region13
    $region12: #{tpu_custom_call.1} parent=1 // pred_region
      %s39 = ssub.s32 16, 16
      %40 = vsyncadd [#allocation5], %s39
      %s42 = sshll.u32 %s2, 4
      %s43 = int_to_ptr.vmem [resolvable:$true] %s42
      %45 = dma.vmem_to_smem %s43, 16, [#allocation8], [#allocation5]
    $region13: #{tpu_custom_call.1} parent=1 // pred_fallthru
      _
    // Predicated region
    $region14: #{tpu_custom_call.1} parent=1 // pred_check
      _
    $region15: #{tpu_custom_call.1} parent=1 // pred_check_branch
      %47 = sbr.rel (0) target = $region17
    $region16: #{tpu_custom_call.1} parent=1 // pred_region
      %s49 = ssub.s32 16, 16
      %50 = vsyncadd [#allocation10], %s49
      %s52 = sshll.u32 %s3, 4
      %s53 = int_to_ptr.vmem [resolvable:$true] %s52
      %55 = dma.vmem_to_smem %s53, 16, [#allocation9], [#allocation10]
    $region17: #{tpu_custom_call.1} parent=1 // pred_fallthru
      _
    // Predicated region
    $region18: #{tpu_custom_call.1} parent=1 // pred_check
      _
    $region19: #{tpu_custom_call.1} parent=1 // pred_check_branch
      %57 = sbr.rel (0) target = $region21
    $region20: #{tpu_custom_call.1} parent=1 // pred_region
      %58 = dma.done [#allocation3], 3584
    $region21: #{tpu_custom_call.1} parent=1 // pred_fallthru
      _
    // Predicated region
    $region22: #{tpu_custom_call.1} parent=1 // pred_check
      _
    $region23: #{tpu_custom_call.1} parent=1 // pred_check_branch
      %60 = sbr.rel (0) target = $region25
    $region24: #{tpu_custom_call.1} parent=1 // pred_region
      %61 = dma.done [#allocation7], 448
    $region25: #{tpu_custom_call.1} parent=1 // pred_fallthru
      _
    // Predicated region
    $region26: #{tpu_custom_call.1} parent=1 // pred_check
      _
    $region27: #{tpu_custom_call.1} parent=1 // pred_check_branch
      %63 = sbr.rel (0) target = $region29
    $region28: #{tpu_custom_call.1} parent=1 // pred_region
      %64 = dma.done [#allocation5], 16
    $region29: #{tpu_custom_call.1} parent=1 // pred_fallthru
      _
    // Predicated region
    $region30: #{tpu_custom_call.1} parent=1 // pred_check
      _
    $region31: #{tpu_custom_call.1} parent=1 // pred_check_branch
      %66 = sbr.rel (0) target = $region33
    $region32: #{tpu_custom_call.1} parent=1 // pred_region
      %67 = dma.done [#allocation10], 16
    $region33: #{tpu_custom_call.1} parent=1 // pred_fallthru
      _
    %68 = sfence
    %v69 = vld [vmem:[#allocation2] sm:$0xff]
    %v70 = vld [vmem:[#allocation2 + $0x8] sm:$0xff]
    %v71 = vld [vmem:[#allocation2 + $0x10] sm:$0xff]
    %v72 = vld [vmem:[#allocation2 + $0x18] sm:$0xff]
    %v73 = vld [vmem:[#allocation2 + $0x20] sm:$0xff]
    %v74 = vld [vmem:[#allocation2 + $0x28] sm:$0xff]
    %v75 = vld [vmem:[#allocation2 + $0x30] sm:$0xff]
    %v76 = vld [vmem:[#allocation2 + $0x38] sm:$0xff]
    %v77 = vld [vmem:[#allocation2 + $0x40] sm:$0xff]
    %v78 = vld [vmem:[#allocation2 + $0x48] sm:$0xff]
    %v79 = vld [vmem:[#allocation2 + $0x50] sm:$0xff]
    %v80 = vld [vmem:[#allocation2 + $0x58] sm:$0xff]
    %v81 = vld [vmem:[#allocation2 + $0x60] sm:$0xff]
    %v82 = vld [vmem:[#allocation2 + $0x68] sm:$0xff]
    %v83 = vld [vmem:[#allocation2 + $0x70] sm:$0xff]
    %v84 = vld [vmem:[#allocation2 + $0x78] sm:$0xff]
    %v85 = vld [vmem:[#allocation2 + $0x80] sm:$0xff]
    %v86 = vld [vmem:[#allocation2 + $0x88] sm:$0xff]
    %v87 = vld [vmem:[#allocation2 + $0x90] sm:$0xff]
    %v88 = vld [vmem:[#allocation2 + $0x98] sm:$0xff]
    %v89 = vld [vmem:[#allocation2 + $0xa0] sm:$0xff]
    %v90 = vld [vmem:[#allocation2 + $0xa8] sm:$0xff]
    %v91 = vld [vmem:[#allocation2 + $0xb0] sm:$0xff]
    %v92 = vld [vmem:[#allocation2 + $0xb8] sm:$0xff]
    %v93 = vld [vmem:[#allocation2 + $0xc0] sm:$0xff]
    %v94 = vld [vmem:[#allocation2 + $0xc8] sm:$0xff]
    %v95 = vld [vmem:[#allocation2 + $0xd0] sm:$0xff]
    %v96 = vld [vmem:[#allocation2 + $0xd8] sm:$0xff]
    %v97 = vld [vmem:[#allocation6] sm:$0xff]
    %v98 = vld [vmem:[#allocation6 + $0x8] sm:$0xff]
    %v99 = vld [vmem:[#allocation6 + $0x10] sm:$0xff]
    %v100 = vld [vmem:[#allocation6 + $0x18] sm:$0xf]
    %v101 = vlaneseq
    %v102 = vshrl.u32 %v101, 7
    %vm103 = vcmp.eq.s32.totalorder %v102, 0
    %s104 = sld [smem:[#allocation9]]
    %s105 = sld [smem:[#allocation8]]
    %v106 = vstv %s105
    %v107 = vmul.f32 %v106, %v69
    %v108 = vmul.f32 %v106, %v70
    %v109 = vmul.f32 %v106, %v71
    %v110 = vmul.f32 %v106, %v72
    %v111 = vmul.f32 %v106, %v73
    %v112 = vmul.f32 %v106, %v74
    %v113 = vmul.f32 %v106, %v75
    %v114 = vstv %s104
    %v115 = vadd.f32 %v114, %v107
    %v116 = vadd.f32 %v114, %v108
    %v117 = vadd.f32 %v114, %v109
    %v118 = vadd.f32 %v114, %v110
    %v119 = vadd.f32 %v114, %v111
    %v120 = vadd.f32 %v114, %v112
    %v121 = vadd.f32 %v114, %v113
    %s122 = sld [smem:[#allocation8 + $0x1]]
    %v123 = vstv %s122
    %v124 = vmul.f32 %v123, %v76
    %v125 = vmul.f32 %v123, %v77
    %v126 = vmul.f32 %v123, %v78
    %v127 = vmul.f32 %v123, %v79
    %v128 = vmul.f32 %v123, %v80
    %v129 = vmul.f32 %v123, %v81
    %v130 = vmul.f32 %v123, %v82
    %v131 = vadd.f32 %v115, %v124
    %v132 = vadd.f32 %v116, %v125
    %v133 = vadd.f32 %v117, %v126
    %v134 = vadd.f32 %v118, %v127
    %v135 = vadd.f32 %v119, %v128
    %v136 = vadd.f32 %v120, %v129
    %v137 = vadd.f32 %v121, %v130
    %s138 = sld [smem:[#allocation8 + $0x2]]
    %v139 = vstv %s138
    %v140 = vmul.f32 %v139, %v83
    %v141 = vmul.f32 %v139, %v84
    %v142 = vmul.f32 %v139, %v85
    %v143 = vmul.f32 %v139, %v86
    %v144 = vmul.f32 %v139, %v87
    %v145 = vmul.f32 %v139, %v88
    %v146 = vmul.f32 %v139, %v89
    %v147 = vadd.f32 %v131, %v140
    %v148 = vadd.f32 %v132, %v141
    %v149 = vadd.f32 %v133, %v142
    %v150 = vadd.f32 %v134, %v143
    %v151 = vadd.f32 %v135, %v144
    %v152 = vadd.f32 %v136, %v145
    %v153 = vadd.f32 %v137, %v146
    %s154 = sld [smem:[#allocation8 + $0x3]]
    %v155 = vstv %s154
    %v156 = vmul.f32 %v155, %v90
    %v157 = vmul.f32 %v155, %v91
    %v158 = vmul.f32 %v155, %v92
    %v159 = vmul.f32 %v155, %v93
    %v160 = vmul.f32 %v155, %v94
    %v161 = vmul.f32 %v155, %v95
    %v162 = vmul.f32 %v155, %v96
    %v163 = vadd.f32 %v147, %v156
    %v164 = vadd.f32 %v148, %v157
    %v165 = vadd.f32 %v149, %v158
    %v166 = vadd.f32 %v150, %v159
    %v167 = vadd.f32 %v151, %v160
    %v168 = vadd.f32 %v152, %v161
    %v169 = vadd.f32 %v153, %v162
    %s170 = sld [smem:[#allocation8 + $0x10]]
    %v171 = vstv %s170
    %v172 = vmul.f32 %v171, %v97
    %v173 = vmul.f32 %v171, %v98
    %v174 = vmul.f32 %v171, %v99
    %v175 = vmul.f32 %v171, %v100
    %s176 = sld [smem:[#allocation8 + $0x11]]
    %v177 = vstv %s176
    %v178 = vmul.f32 %v177, %v97
    %v179 = vmul.f32 %v177, %v98
    %v180 = vmul.f32 %v177, %v99
    %v181 = vmul.f32 %v177, %v100
    %v186 = vrot.slane %v178, 5
    %v187 = vrot.slane %v186, 4
    %v188 = vrot.slane %v179, 5
    %v189 = vrot.slane %v188, 4
    %v190 = vrot.slane %v180, 5
    %v191 = vrot.slane %v190, 4
    %v192 = vrot.slane %v181, 5
    %v193 = vrot.slane %v192, 4
    %v198 = vadd.f32 %v172, %v187
    %v199 = vadd.f32 %v173, %v189
    %v200 = vadd.f32 %v174, %v191
    %v201 = vadd.f32 %v175, %v193
    %s202 = sld [smem:[#allocation8 + $0x12]]
    %v203 = vstv %s202
    %v204 = vmul.f32 %v203, %v97
    %v205 = vmul.f32 %v203, %v98
    %v206 = vmul.f32 %v203, %v99
    %v207 = vmul.f32 %v203, %v100
    %v212 = vrot.slane %v204, 6
    %v213 = vrot.slane %v212, 4
    %v214 = vrot.slane %v205, 6
    %v215 = vrot.slane %v214, 4
    %v216 = vrot.slane %v206, 6
    %v217 = vrot.slane %v216, 4
    %v218 = vrot.slane %v207, 6
    %v219 = vrot.slane %v218, 4
    %v224 = vadd.f32 %v198, %v213
    %v225 = vadd.f32 %v199, %v215
    %v226 = vadd.f32 %v200, %v217
    %v227 = vadd.f32 %v201, %v219
    %s228 = sld [smem:[#allocation8 + $0x13]]
    %v229 = vstv %s228
    %v230 = vmul.f32 %v229, %v97
    %v231 = vmul.f32 %v229, %v98
    %v232 = vmul.f32 %v229, %v99
    %v233 = vmul.f32 %v229, %v100
    %v238 = vrot.slane %v230, 7
    %v239 = vrot.slane %v238, 4
    %v240 = vrot.slane %v231, 7
    %v241 = vrot.slane %v240, 4
    %v242 = vrot.slane %v232, 7
    %v243 = vrot.slane %v242, 4
    %v244 = vrot.slane %v233, 7
    %v245 = vrot.slane %v244, 4
    %v250 = vadd.f32 %v224, %v239
    %v251 = vadd.f32 %v225, %v241
    %v252 = vadd.f32 %v226, %v243
    %v253 = vadd.f32 %v227, %v245
    %s254 = sld [smem:[#allocation9 + $0x4]]
    %v255 = vstv %s254
    %v256 = vadd.f32 %v250, %v255
    %v257 = vadd.f32 %v251, %v255
    %v258 = vadd.f32 %v252, %v255
    %v259 = vadd.f32 %v253, %v255
    %s260 = sld [smem:[#allocation9 + $0x8]]
    %v265 = vlaneseq
    %v266 = vshrl.u32 %v265, 7
    %v267 = vsub.s32 0, %v266
    %v268 = vrot.slane %v256, %v267
    %v269 = vlaneseq
    %v270 = vshrl.u32 %v269, 7
    %v271 = vsub.s32 4, %v270
    %v272 = vrot.slane %v256, %v271
    %v273 = vlaneseq
    %v274 = vshrl.u32 %v273, 7
    %v275 = vsub.s32 0, %v274
    %v276 = vrot.slane %v257, %v275
    %v277 = vlaneseq
    %v278 = vshrl.u32 %v277, 7
    %v279 = vsub.s32 4, %v278
    %v280 = vrot.slane %v257, %v279
    %v281 = vlaneseq
    %v282 = vshrl.u32 %v281, 7
    %v283 = vsub.s32 0, %v282
    %v284 = vrot.slane %v258, %v283
    %v285 = vlaneseq
    %v286 = vshrl.u32 %v285, 7
    %v287 = vsub.s32 4, %v286
    %v288 = vrot.slane %v258, %v287
    %v289 = vlaneseq
    %v290 = vshrl.u32 %v289, 7
    %v291 = vsub.s32 0, %v290
    %v292 = vrot.slane %v259, %v291
    %v300 = vlaneseq
    %v301 = vshrl.u32 %v300, 7
    %v302 = vsub.s32 0, %v301
    %v303 = vrot.slane %v268, %v302
    %v304 = vlaneseq
    %v305 = vshrl.u32 %v304, 7
    %v306 = vsub.s32 0, %v305
    %v307 = vrot.slane %v272, %v306
    %v308 = vlaneseq
    %v309 = vshrl.u32 %v308, 7
    %v310 = vsub.s32 0, %v309
    %v311 = vrot.slane %v276, %v310
    %v312 = vlaneseq
    %v313 = vshrl.u32 %v312, 7
    %v314 = vsub.s32 0, %v313
    %v315 = vrot.slane %v280, %v314
    %v316 = vlaneseq
    %v317 = vshrl.u32 %v316, 7
    %v318 = vsub.s32 0, %v317
    %v319 = vrot.slane %v284, %v318
    %v320 = vlaneseq
    %v321 = vshrl.u32 %v320, 7
    %v322 = vsub.s32 0, %v321
    %v323 = vrot.slane %v288, %v322
    %v324 = vlaneseq
    %v325 = vshrl.u32 %v324, 7
    %v326 = vsub.s32 0, %v325
    %v327 = vrot.slane %v292, %v326
    %v328 = vstv %s260
    %v329 = vsel %vm103, %v303, %v328
    %v330 = vsel %vm103, %v307, %v328
    %v331 = vsel %vm103, %v311, %v328
    %v332 = vsel %vm103, %v315, %v328
    %v333 = vsel %vm103, %v319, %v328
    %v334 = vsel %vm103, %v323, %v328
    %v335 = vsel %vm103, %v327, %v328
    %v336 = vadd.f32 %v163, %v329
    %v337 = vadd.f32 %v164, %v330
    %v338 = vadd.f32 %v165, %v331
    %v339 = vadd.f32 %v166, %v332
    %v340 = vadd.f32 %v167, %v333
    %v341 = vadd.f32 %v168, %v334
    %v342 = vadd.f32 %v169, %v335
    %v343 = vmax.f32 %v336, 0.0
    %v344 = vmax.f32 %v337, 0.0
    %v345 = vmax.f32 %v338, 0.0
    %v346 = vmax.f32 %v339, 0.0
    %v347 = vmax.f32 %v340, 0.0
    %v348 = vmax.f32 %v341, 0.0
    %v349 = vmax.f32 %v342, 0.0
    %s350 = sld [smem:[#allocation9 + $0x10]]
    %v351 = vstv %s350
    %v352 = vmul.f32 %v351, %v343
    %v353 = vmul.f32 %v351, %v344
    %v354 = vmul.f32 %v351, %v345
    %v355 = vmul.f32 %v351, %v346
    %v356 = vmul.f32 %v351, %v347
    %v357 = vmul.f32 %v351, %v348
    %v358 = vmul.f32 %v351, %v349
    %s359 = sld [smem:[#allocation9 + $0x1]]
    %s360 = sld [smem:[#allocation8 + $0x4]]
    %v361 = vstv %s360
    %v362 = vmul.f32 %v361, %v69
    %v363 = vmul.f32 %v361, %v70
    %v364 = vmul.f32 %v361, %v71
    %v365 = vmul.f32 %v361, %v72
    %v366 = vmul.f32 %v361, %v73
    %v367 = vmul.f32 %v361, %v74
    %v368 = vmul.f32 %v361, %v75
    %v369 = vstv %s359
    %v370 = vadd.f32 %v369, %v362
    %v371 = vadd.f32 %v369, %v363
    %v372 = vadd.f32 %v369, %v364
    %v373 = vadd.f32 %v369, %v365
    %v374 = vadd.f32 %v369, %v366
    %v375 = vadd.f32 %v369, %v367
    %v376 = vadd.f32 %v369, %v368
    %s377 = sld [smem:[#allocation8 + $0x5]]
    %v378 = vstv %s377
    %v379 = vmul.f32 %v378, %v76
    %v380 = vmul.f32 %v378, %v77
    %v381 = vmul.f32 %v378, %v78
    %v382 = vmul.f32 %v378, %v79
    %v383 = vmul.f32 %v378, %v80
    %v384 = vmul.f32 %v378, %v81
    %v385 = vmul.f32 %v378, %v82
    %v386 = vadd.f32 %v370, %v379
    %v387 = vadd.f32 %v371, %v380
    %v388 = vadd.f32 %v372, %v381
    %v389 = vadd.f32 %v373, %v382
    %v390 = vadd.f32 %v374, %v383
    %v391 = vadd.f32 %v375, %v384
    %v392 = vadd.f32 %v376, %v385
    %s393 = sld [smem:[#allocation8 + $0x6]]
    %v394 = vstv %s393
    %v395 = vmul.f32 %v394, %v83
    %v396 = vmul.f32 %v394, %v84
    %v397 = vmul.f32 %v394, %v85
    %v398 = vmul.f32 %v394, %v86
    %v399 = vmul.f32 %v394, %v87
    %v400 = vmul.f32 %v394, %v88
    %v401 = vmul.f32 %v394, %v89
    %v402 = vadd.f32 %v386, %v395
    %v403 = vadd.f32 %v387, %v396
    %v404 = vadd.f32 %v388, %v397
    %v405 = vadd.f32 %v389, %v398
    %v406 = vadd.f32 %v390, %v399
    %v407 = vadd.f32 %v391, %v400
    %v408 = vadd.f32 %v392, %v401
    %s409 = sld [smem:[#allocation8 + $0x7]]
    %v410 = vstv %s409
    %v411 = vmul.f32 %v410, %v90
    %v412 = vmul.f32 %v410, %v91
    %v413 = vmul.f32 %v410, %v92
    %v414 = vmul.f32 %v410, %v93
    %v415 = vmul.f32 %v410, %v94
    %v416 = vmul.f32 %v410, %v95
    %v417 = vmul.f32 %v410, %v96
    %v418 = vadd.f32 %v402, %v411
    %v419 = vadd.f32 %v403, %v412
    %v420 = vadd.f32 %v404, %v413
    %v421 = vadd.f32 %v405, %v414
    %v422 = vadd.f32 %v406, %v415
    %v423 = vadd.f32 %v407, %v416
    %v424 = vadd.f32 %v408, %v417
    %s425 = sld [smem:[#allocation8 + $0x14]]
    %v426 = vstv %s425
    %v427 = vmul.f32 %v426, %v97
    %v428 = vmul.f32 %v426, %v98
    %v429 = vmul.f32 %v426, %v99
    %v430 = vmul.f32 %v426, %v100
    %s431 = sld [smem:[#allocation8 + $0x15]]
    %v432 = vstv %s431
    %v433 = vmul.f32 %v432, %v97
    %v434 = vmul.f32 %v432, %v98
    %v435 = vmul.f32 %v432, %v99
    %v436 = vmul.f32 %v432, %v100
    %v441 = vrot.slane %v433, 5
    %v442 = vrot.slane %v441, 4
    %v443 = vrot.slane %v434, 5
    %v444 = vrot.slane %v443, 4
    %v445 = vrot.slane %v435, 5
    %v446 = vrot.slane %v445, 4
    %v447 = vrot.slane %v436, 5
    %v448 = vrot.slane %v447, 4
    %v453 = vadd.f32 %v427, %v442
    %v454 = vadd.f32 %v428, %v444
    %v455 = vadd.f32 %v429, %v446
    %v456 = vadd.f32 %v430, %v448
    %s457 = sld [smem:[#allocation8 + $0x16]]
    %v458 = vstv %s457
    %v459 = vmul.f32 %v458, %v97
    %v460 = vmul.f32 %v458, %v98
    %v461 = vmul.f32 %v458, %v99
    %v462 = vmul.f32 %v458, %v100
    %v467 = vrot.slane %v459, 6
    %v468 = vrot.slane %v467, 4
    %v469 = vrot.slane %v460, 6
    %v470 = vrot.slane %v469, 4
    %v471 = vrot.slane %v461, 6
    %v472 = vrot.slane %v471, 4
    %v473 = vrot.slane %v462, 6
    %v474 = vrot.slane %v473, 4
    %v479 = vadd.f32 %v453, %v468
    %v480 = vadd.f32 %v454, %v470
    %v481 = vadd.f32 %v455, %v472
    %v482 = vadd.f32 %v456, %v474
    %s483 = sld [smem:[#allocation8 + $0x17]]
    %v484 = vstv %s483
    %v485 = vmul.f32 %v484, %v97
    %v486 = vmul.f32 %v484, %v98
    %v487 = vmul.f32 %v484, %v99
    %v488 = vmul.f32 %v484, %v100
    %v493 = vrot.slane %v485, 7
    %v494 = vrot.slane %v493, 4
    %v495 = vrot.slane %v486, 7
    %v496 = vrot.slane %v495, 4
    %v497 = vrot.slane %v487, 7
    %v498 = vrot.slane %v497, 4
    %v499 = vrot.slane %v488, 7
    %v500 = vrot.slane %v499, 4
    %v505 = vadd.f32 %v479, %v494
    %v506 = vadd.f32 %v480, %v496
    %v507 = vadd.f32 %v481, %v498
    %v508 = vadd.f32 %v482, %v500
    %s509 = sld [smem:[#allocation9 + $0x5]]
    %v510 = vstv %s509
    %v511 = vadd.f32 %v505, %v510
    %v512 = vadd.f32 %v506, %v510
    %v513 = vadd.f32 %v507, %v510
    %v514 = vadd.f32 %v508, %v510
    %s515 = sld [smem:[#allocation9 + $0x9]]
    %v520 = vlaneseq
    %v521 = vshrl.u32 %v520, 7
    %v522 = vsub.s32 0, %v521
    %v523 = vrot.slane %v511, %v522
    %v524 = vlaneseq
    %v525 = vshrl.u32 %v524, 7
    %v526 = vsub.s32 4, %v525
    %v527 = vrot.slane %v511, %v526
    %v528 = vlaneseq
    %v529 = vshrl.u32 %v528, 7
    %v530 = vsub.s32 0, %v529
    %v531 = vrot.slane %v512, %v530
    %v532 = vlaneseq
    %v533 = vshrl.u32 %v532, 7
    %v534 = vsub.s32 4, %v533
    %v535 = vrot.slane %v512, %v534
    %v536 = vlaneseq
    %v537 = vshrl.u32 %v536, 7
    %v538 = vsub.s32 0, %v537
    %v539 = vrot.slane %v513, %v538
    %v540 = vlaneseq
    %v541 = vshrl.u32 %v540, 7
    %v542 = vsub.s32 4, %v541
    %v543 = vrot.slane %v513, %v542
    %v544 = vlaneseq
    %v545 = vshrl.u32 %v544, 7
    %v546 = vsub.s32 0, %v545
    %v547 = vrot.slane %v514, %v546
    %v555 = vlaneseq
    %v556 = vshrl.u32 %v555, 7
    %v557 = vsub.s32 0, %v556
    %v558 = vrot.slane %v523, %v557
    %v559 = vlaneseq
    %v560 = vshrl.u32 %v559, 7
    %v561 = vsub.s32 0, %v560
    %v562 = vrot.slane %v527, %v561
    %v563 = vlaneseq
    %v564 = vshrl.u32 %v563, 7
    %v565 = vsub.s32 0, %v564
    %v566 = vrot.slane %v531, %v565
    %v567 = vlaneseq
    %v568 = vshrl.u32 %v567, 7
    %v569 = vsub.s32 0, %v568
    %v570 = vrot.slane %v535, %v569
    %v571 = vlaneseq
    %v572 = vshrl.u32 %v571, 7
    %v573 = vsub.s32 0, %v572
    %v574 = vrot.slane %v539, %v573
    %v575 = vlaneseq
    %v576 = vshrl.u32 %v575, 7
    %v577 = vsub.s32 0, %v576
    %v578 = vrot.slane %v543, %v577
    %v579 = vlaneseq
    %v580 = vshrl.u32 %v579, 7
    %v581 = vsub.s32 0, %v580
    %v582 = vrot.slane %v547, %v581
    %v583 = vstv %s515
    %v584 = vsel %vm103, %v558, %v583
    %v585 = vsel %vm103, %v562, %v583
    %v586 = vsel %vm103, %v566, %v583
    %v587 = vsel %vm103, %v570, %v583
    %v588 = vsel %vm103, %v574, %v583
    %v589 = vsel %vm103, %v578, %v583
    %v590 = vsel %vm103, %v582, %v583
    %v591 = vadd.f32 %v418, %v584
    %v592 = vadd.f32 %v419, %v585
    %v593 = vadd.f32 %v420, %v586
    %v594 = vadd.f32 %v421, %v587
    %v595 = vadd.f32 %v422, %v588
    %v596 = vadd.f32 %v423, %v589
    %v597 = vadd.f32 %v424, %v590
    %v598 = vmax.f32 %v591, 0.0
    %v599 = vmax.f32 %v592, 0.0
    %v600 = vmax.f32 %v593, 0.0
    %v601 = vmax.f32 %v594, 0.0
    %v602 = vmax.f32 %v595, 0.0
    %v603 = vmax.f32 %v596, 0.0
    %v604 = vmax.f32 %v597, 0.0
    %s605 = sld [smem:[#allocation9 + $0x11]]
    %v606 = vstv %s605
    %v607 = vmul.f32 %v606, %v598
    %v608 = vmul.f32 %v606, %v599
    %v609 = vmul.f32 %v606, %v600
    %v610 = vmul.f32 %v606, %v601
    %v611 = vmul.f32 %v606, %v602
    %v612 = vmul.f32 %v606, %v603
    %v613 = vmul.f32 %v606, %v604
    %v614 = vadd.f32 %v352, %v607
    %v615 = vadd.f32 %v353, %v608
    %v616 = vadd.f32 %v354, %v609
    %v617 = vadd.f32 %v355, %v610
    %v618 = vadd.f32 %v356, %v611
    %v619 = vadd.f32 %v357, %v612
    %v620 = vadd.f32 %v358, %v613
    %s621 = sld [smem:[#allocation9 + $0x2]]
    %s622 = sld [smem:[#allocation8 + $0x8]]
    %v623 = vstv %s622
    %v624 = vmul.f32 %v623, %v69
    %v625 = vmul.f32 %v623, %v70
    %v626 = vmul.f32 %v623, %v71
    %v627 = vmul.f32 %v623, %v72
    %v628 = vmul.f32 %v623, %v73
    %v629 = vmul.f32 %v623, %v74
    %v630 = vmul.f32 %v623, %v75
    %v631 = vstv %s621
    %v632 = vadd.f32 %v631, %v624
    %v633 = vadd.f32 %v631, %v625
    %v634 = vadd.f32 %v631, %v626
    %v635 = vadd.f32 %v631, %v627
    %v636 = vadd.f32 %v631, %v628
    %v637 = vadd.f32 %v631, %v629
    %v638 = vadd.f32 %v631, %v630
    %s639 = sld [smem:[#allocation8 + $0x9]]
    %v640 = vstv %s639
    %v641 = vmul.f32 %v640, %v76
    %v642 = vmul.f32 %v640, %v77
    %v643 = vmul.f32 %v640, %v78
    %v644 = vmul.f32 %v640, %v79
    %v645 = vmul.f32 %v640, %v80
    %v646 = vmul.f32 %v640, %v81
    %v647 = vmul.f32 %v640, %v82
    %v648 = vadd.f32 %v632, %v641
    %v649 = vadd.f32 %v633, %v642
    %v650 = vadd.f32 %v634, %v643
    %v651 = vadd.f32 %v635, %v644
    %v652 = vadd.f32 %v636, %v645
    %v653 = vadd.f32 %v637, %v646
    %v654 = vadd.f32 %v638, %v647
    %s655 = sld [smem:[#allocation8 + $0xa]]
    %v656 = vstv %s655
    %v657 = vmul.f32 %v656, %v83
    %v658 = vmul.f32 %v656, %v84
    %v659 = vmul.f32 %v656, %v85
    %v660 = vmul.f32 %v656, %v86
    %v661 = vmul.f32 %v656, %v87
    %v662 = vmul.f32 %v656, %v88
    %v663 = vmul.f32 %v656, %v89
    %v664 = vadd.f32 %v648, %v657
    %v665 = vadd.f32 %v649, %v658
    %v666 = vadd.f32 %v650, %v659
    %v667 = vadd.f32 %v651, %v660
    %v668 = vadd.f32 %v652, %v661
    %v669 = vadd.f32 %v653, %v662
    %v670 = vadd.f32 %v654, %v663
    %s671 = sld [smem:[#allocation8 + $0xb]]
    %v672 = vstv %s671
    %v673 = vmul.f32 %v672, %v90
    %v674 = vmul.f32 %v672, %v91
    %v675 = vmul.f32 %v672, %v92
    %v676 = vmul.f32 %v672, %v93
    %v677 = vmul.f32 %v672, %v94
    %v678 = vmul.f32 %v672, %v95
    %v679 = vmul.f32 %v672, %v96
    %v680 = vadd.f32 %v664, %v673
    %v681 = vadd.f32 %v665, %v674
    %v682 = vadd.f32 %v666, %v675
    %v683 = vadd.f32 %v667, %v676
    %v684 = vadd.f32 %v668, %v677
    %v685 = vadd.f32 %v669, %v678
    %v686 = vadd.f32 %v670, %v679
    %s687 = sld [smem:[#allocation8 + $0x18]]
    %v688 = vstv %s687
    %v689 = vmul.f32 %v688, %v97
    %v690 = vmul.f32 %v688, %v98
    %v691 = vmul.f32 %v688, %v99
    %v692 = vmul.f32 %v688, %v100
    %s693 = sld [smem:[#allocation8 + $0x19]]
    %v694 = vstv %s693
    %v695 = vmul.f32 %v694, %v97
    %v696 = vmul.f32 %v694, %v98
    %v697 = vmul.f32 %v694, %v99
    %v698 = vmul.f32 %v694, %v100
    %v703 = vrot.slane %v695, 5
    %v704 = vrot.slane %v703, 4
    %v705 = vrot.slane %v696, 5
    %v706 = vrot.slane %v705, 4
    %v707 = vrot.slane %v697, 5
    %v708 = vrot.slane %v707, 4
    %v709 = vrot.slane %v698, 5
    %v710 = vrot.slane %v709, 4
    %v715 = vadd.f32 %v689, %v704
    %v716 = vadd.f32 %v690, %v706
    %v717 = vadd.f32 %v691, %v708
    %v718 = vadd.f32 %v692, %v710
    %s719 = sld [smem:[#allocation8 + $0x1a]]
    %v720 = vstv %s719
    %v721 = vmul.f32 %v720, %v97
    %v722 = vmul.f32 %v720, %v98
    %v723 = vmul.f32 %v720, %v99
    %v724 = vmul.f32 %v720, %v100
    %v729 = vrot.slane %v721, 6
    %v730 = vrot.slane %v729, 4
    %v731 = vrot.slane %v722, 6
    %v732 = vrot.slane %v731, 4
    %v733 = vrot.slane %v723, 6
    %v734 = vrot.slane %v733, 4
    %v735 = vrot.slane %v724, 6
    %v736 = vrot.slane %v735, 4
    %v741 = vadd.f32 %v715, %v730
    %v742 = vadd.f32 %v716, %v732
    %v743 = vadd.f32 %v717, %v734
    %v744 = vadd.f32 %v718, %v736
    %s745 = sld [smem:[#allocation8 + $0x1b]]
    %v746 = vstv %s745
    %v747 = vmul.f32 %v746, %v97
    %v748 = vmul.f32 %v746, %v98
    %v749 = vmul.f32 %v746, %v99
    %v750 = vmul.f32 %v746, %v100
    %v755 = vrot.slane %v747, 7
    %v756 = vrot.slane %v755, 4
    %v757 = vrot.slane %v748, 7
    %v758 = vrot.slane %v757, 4
    %v759 = vrot.slane %v749, 7
    %v760 = vrot.slane %v759, 4
    %v761 = vrot.slane %v750, 7
    %v762 = vrot.slane %v761, 4
    %v767 = vadd.f32 %v741, %v756
    %v768 = vadd.f32 %v742, %v758
    %v769 = vadd.f32 %v743, %v760
    %v770 = vadd.f32 %v744, %v762
    %s771 = sld [smem:[#allocation9 + $0x6]]
    %v772 = vstv %s771
    %v773 = vadd.f32 %v767, %v772
    %v774 = vadd.f32 %v768, %v772
    %v775 = vadd.f32 %v769, %v772
    %v776 = vadd.f32 %v770, %v772
    %s777 = sld [smem:[#allocation9 + $0xa]]
    %v782 = vlaneseq
    %v783 = vshrl.u32 %v782, 7
    %v784 = vsub.s32 0, %v783
    %v785 = vrot.slane %v773, %v784
    %v786 = vlaneseq
    %v787 = vshrl.u32 %v786, 7
    %v788 = vsub.s32 4, %v787
    %v789 = vrot.slane %v773, %v788
    %v790 = vlaneseq
    %v791 = vshrl.u32 %v790, 7
    %v792 = vsub.s32 0, %v791
    %v793 = vrot.slane %v774, %v792
    %v794 = vlaneseq
    %v795 = vshrl.u32 %v794, 7
    %v796 = vsub.s32 4, %v795
    %v797 = vrot.slane %v774, %v796
    %v798 = vlaneseq
    %v799 = vshrl.u32 %v798, 7
    %v800 = vsub.s32 0, %v799
    %v801 = vrot.slane %v775, %v800
    %v802 = vlaneseq
    %v803 = vshrl.u32 %v802, 7
    %v804 = vsub.s32 4, %v803
    %v805 = vrot.slane %v775, %v804
    %v806 = vlaneseq
    %v807 = vshrl.u32 %v806, 7
    %v808 = vsub.s32 0, %v807
    %v809 = vrot.slane %v776, %v808
    %v817 = vlaneseq
    %v818 = vshrl.u32 %v817, 7
    %v819 = vsub.s32 0, %v818
    %v820 = vrot.slane %v785, %v819
    %v821 = vlaneseq
    %v822 = vshrl.u32 %v821, 7
    %v823 = vsub.s32 0, %v822
    %v824 = vrot.slane %v789, %v823
    %v825 = vlaneseq
    %v826 = vshrl.u32 %v825, 7
    %v827 = vsub.s32 0, %v826
    %v828 = vrot.slane %v793, %v827
    %v829 = vlaneseq
    %v830 = vshrl.u32 %v829, 7
    %v831 = vsub.s32 0, %v830
    %v832 = vrot.slane %v797, %v831
    %v833 = vlaneseq
    %v834 = vshrl.u32 %v833, 7
    %v835 = vsub.s32 0, %v834
    %v836 = vrot.slane %v801, %v835
    %v837 = vlaneseq
    %v838 = vshrl.u32 %v837, 7
    %v839 = vsub.s32 0, %v838
    %v840 = vrot.slane %v805, %v839
    %v841 = vlaneseq
    %v842 = vshrl.u32 %v841, 7
    %v843 = vsub.s32 0, %v842
    %v844 = vrot.slane %v809, %v843
    %v845 = vstv %s777
    %v846 = vsel %vm103, %v820, %v845
    %v847 = vsel %vm103, %v824, %v845
    %v848 = vsel %vm103, %v828, %v845
    %v849 = vsel %vm103, %v832, %v845
    %v850 = vsel %vm103, %v836, %v845
    %v851 = vsel %vm103, %v840, %v845
    %v852 = vsel %vm103, %v844, %v845
    %v853 = vadd.f32 %v680, %v846
    %v854 = vadd.f32 %v681, %v847
    %v855 = vadd.f32 %v682, %v848
    %v856 = vadd.f32 %v683, %v849
    %v857 = vadd.f32 %v684, %v850
    %v858 = vadd.f32 %v685, %v851
    %v859 = vadd.f32 %v686, %v852
    %v860 = vmax.f32 %v853, 0.0
    %v861 = vmax.f32 %v854, 0.0
    %v862 = vmax.f32 %v855, 0.0
    %v863 = vmax.f32 %v856, 0.0
    %v864 = vmax.f32 %v857, 0.0
    %v865 = vmax.f32 %v858, 0.0
    %v866 = vmax.f32 %v859, 0.0
    %s867 = sld [smem:[#allocation9 + $0x12]]
    %v868 = vstv %s867
    %v869 = vmul.f32 %v868, %v860
    %v870 = vmul.f32 %v868, %v861
    %v871 = vmul.f32 %v868, %v862
    %v872 = vmul.f32 %v868, %v863
    %v873 = vmul.f32 %v868, %v864
    %v874 = vmul.f32 %v868, %v865
    %v875 = vmul.f32 %v868, %v866
    %v876 = vadd.f32 %v614, %v869
    %v877 = vadd.f32 %v615, %v870
    %v878 = vadd.f32 %v616, %v871
    %v879 = vadd.f32 %v617, %v872
    %v880 = vadd.f32 %v618, %v873
    %v881 = vadd.f32 %v619, %v874
    %v882 = vadd.f32 %v620, %v875
    %s883 = sld [smem:[#allocation9 + $0x3]]
    %s884 = sld [smem:[#allocation8 + $0xc]]
    %v885 = vstv %s884
    %v886 = vmul.f32 %v885, %v69
    %v887 = vmul.f32 %v885, %v70
    %v888 = vmul.f32 %v885, %v71
    %v889 = vmul.f32 %v885, %v72
    %v890 = vmul.f32 %v885, %v73
    %v891 = vmul.f32 %v885, %v74
    %v892 = vmul.f32 %v885, %v75
    %v893 = vstv %s883
    %v894 = vadd.f32 %v893, %v886
    %v895 = vadd.f32 %v893, %v887
    %v896 = vadd.f32 %v893, %v888
    %v897 = vadd.f32 %v893, %v889
    %v898 = vadd.f32 %v893, %v890
    %v899 = vadd.f32 %v893, %v891
    %v900 = vadd.f32 %v893, %v892
    %s901 = sld [smem:[#allocation8 + $0xd]]
    %v902 = vstv %s901
    %v903 = vmul.f32 %v902, %v76
    %v904 = vmul.f32 %v902, %v77
    %v905 = vmul.f32 %v902, %v78
    %v906 = vmul.f32 %v902, %v79
    %v907 = vmul.f32 %v902, %v80
    %v908 = vmul.f32 %v902, %v81
    %v909 = vmul.f32 %v902, %v82
    %v910 = vadd.f32 %v894, %v903
    %v911 = vadd.f32 %v895, %v904
    %v912 = vadd.f32 %v896, %v905
    %v913 = vadd.f32 %v897, %v906
    %v914 = vadd.f32 %v898, %v907
    %v915 = vadd.f32 %v899, %v908
    %v916 = vadd.f32 %v900, %v909
    %s917 = sld [smem:[#allocation8 + $0xe]]
    %v918 = vstv %s917
    %v919 = vmul.f32 %v918, %v83
    %v920 = vmul.f32 %v918, %v84
    %v921 = vmul.f32 %v918, %v85
    %v922 = vmul.f32 %v918, %v86
    %v923 = vmul.f32 %v918, %v87
    %v924 = vmul.f32 %v918, %v88
    %v925 = vmul.f32 %v918, %v89
    %v926 = vadd.f32 %v910, %v919
    %v927 = vadd.f32 %v911, %v920
    %v928 = vadd.f32 %v912, %v921
    %v929 = vadd.f32 %v913, %v922
    %v930 = vadd.f32 %v914, %v923
    %v931 = vadd.f32 %v915, %v924
    %v932 = vadd.f32 %v916, %v925
    %s933 = sld [smem:[#allocation8 + $0xf]]
    %v934 = vstv %s933
    %v935 = vmul.f32 %v934, %v90
    %v936 = vmul.f32 %v934, %v91
    %v937 = vmul.f32 %v934, %v92
    %v938 = vmul.f32 %v934, %v93
    %v939 = vmul.f32 %v934, %v94
    %v940 = vmul.f32 %v934, %v95
    %v941 = vmul.f32 %v934, %v96
    %v942 = vadd.f32 %v926, %v935
    %v943 = vadd.f32 %v927, %v936
    %v944 = vadd.f32 %v928, %v937
    %v945 = vadd.f32 %v929, %v938
    %v946 = vadd.f32 %v930, %v939
    %v947 = vadd.f32 %v931, %v940
    %v948 = vadd.f32 %v932, %v941
    %s949 = sld [smem:[#allocation8 + $0x1c]]
    %v950 = vstv %s949
    %v951 = vmul.f32 %v950, %v97
    %v952 = vmul.f32 %v950, %v98
    %v953 = vmul.f32 %v950, %v99
    %v954 = vmul.f32 %v950, %v100
    %s955 = sld [smem:[#allocation8 + $0x1d]]
    %v956 = vstv %s955
    %v957 = vmul.f32 %v956, %v97
    %v958 = vmul.f32 %v956, %v98
    %v959 = vmul.f32 %v956, %v99
    %v960 = vmul.f32 %v956, %v100
    %v965 = vrot.slane %v957, 5
    %v966 = vrot.slane %v965, 4
    %v967 = vrot.slane %v958, 5
    %v968 = vrot.slane %v967, 4
    %v969 = vrot.slane %v959, 5
    %v970 = vrot.slane %v969, 4
    %v971 = vrot.slane %v960, 5
    %v972 = vrot.slane %v971, 4
    %v977 = vadd.f32 %v951, %v966
    %v978 = vadd.f32 %v952, %v968
    %v979 = vadd.f32 %v953, %v970
    %v980 = vadd.f32 %v954, %v972
    %s981 = sld [smem:[#allocation8 + $0x1e]]
    %v982 = vstv %s981
    %v983 = vmul.f32 %v982, %v97
    %v984 = vmul.f32 %v982, %v98
    %v985 = vmul.f32 %v982, %v99
    %v986 = vmul.f32 %v982, %v100
    %v991 = vrot.slane %v983, 6
    %v992 = vrot.slane %v991, 4
    %v993 = vrot.slane %v984, 6
    %v994 = vrot.slane %v993, 4
    %v995 = vrot.slane %v985, 6
    %v996 = vrot.slane %v995, 4
    %v997 = vrot.slane %v986, 6
    %v998 = vrot.slane %v997, 4
    %v1003 = vadd.f32 %v977, %v992
    %v1004 = vadd.f32 %v978, %v994
    %v1005 = vadd.f32 %v979, %v996
    %v1006 = vadd.f32 %v980, %v998
    %s1007 = sld [smem:[#allocation8 + $0x1f]]
    %v1008 = vstv %s1007
    %v1009 = vmul.f32 %v1008, %v97
    %v1010 = vmul.f32 %v1008, %v98
    %v1011 = vmul.f32 %v1008, %v99
    %v1012 = vmul.f32 %v1008, %v100
    %v1017 = vrot.slane %v1009, 7
    %v1018 = vrot.slane %v1017, 4
    %v1019 = vrot.slane %v1010, 7
    %v1020 = vrot.slane %v1019, 4
    %v1021 = vrot.slane %v1011, 7
    %v1022 = vrot.slane %v1021, 4
    %v1023 = vrot.slane %v1012, 7
    %v1024 = vrot.slane %v1023, 4
    %v1029 = vadd.f32 %v1003, %v1018
    %v1030 = vadd.f32 %v1004, %v1020
    %v1031 = vadd.f32 %v1005, %v1022
    %v1032 = vadd.f32 %v1006, %v1024
    %s1033 = sld [smem:[#allocation9 + $0x7]]
    %v1034 = vstv %s1033
    %v1035 = vadd.f32 %v1029, %v1034
    %v1036 = vadd.f32 %v1030, %v1034
    %v1037 = vadd.f32 %v1031, %v1034
    %v1038 = vadd.f32 %v1032, %v1034
    %s1039 = sld [smem:[#allocation9 + $0xb]]
    %v1044 = vlaneseq
    %v1045 = vshrl.u32 %v1044, 7
    %v1046 = vsub.s32 0, %v1045
    %v1047 = vrot.slane %v1035, %v1046
    %v1048 = vlaneseq
    %v1049 = vshrl.u32 %v1048, 7
    %v1050 = vsub.s32 4, %v1049
    %v1051 = vrot.slane %v1035, %v1050
    %v1052 = vlaneseq
    %v1053 = vshrl.u32 %v1052, 7
    %v1054 = vsub.s32 0, %v1053
    %v1055 = vrot.slane %v1036, %v1054
    %v1056 = vlaneseq
    %v1057 = vshrl.u32 %v1056, 7
    %v1058 = vsub.s32 4, %v1057
    %v1059 = vrot.slane %v1036, %v1058
    %v1060 = vlaneseq
    %v1061 = vshrl.u32 %v1060, 7
    %v1062 = vsub.s32 0, %v1061
    %v1063 = vrot.slane %v1037, %v1062
    %v1064 = vlaneseq
    %v1065 = vshrl.u32 %v1064, 7
    %v1066 = vsub.s32 4, %v1065
    %v1067 = vrot.slane %v1037, %v1066
    %v1068 = vlaneseq
    %v1069 = vshrl.u32 %v1068, 7
    %v1070 = vsub.s32 0, %v1069
    %v1071 = vrot.slane %v1038, %v1070
    %v1079 = vlaneseq
    %v1080 = vshrl.u32 %v1079, 7
    %v1081 = vsub.s32 0, %v1080
    %v1082 = vrot.slane %v1047, %v1081
    %v1083 = vlaneseq
    %v1084 = vshrl.u32 %v1083, 7
    %v1085 = vsub.s32 0, %v1084
    %v1086 = vrot.slane %v1051, %v1085
    %v1087 = vlaneseq
    %v1088 = vshrl.u32 %v1087, 7
    %v1089 = vsub.s32 0, %v1088
    %v1090 = vrot.slane %v1055, %v1089
    %v1091 = vlaneseq
    %v1092 = vshrl.u32 %v1091, 7
    %v1093 = vsub.s32 0, %v1092
    %v1094 = vrot.slane %v1059, %v1093
    %v1095 = vlaneseq
    %v1096 = vshrl.u32 %v1095, 7
    %v1097 = vsub.s32 0, %v1096
    %v1098 = vrot.slane %v1063, %v1097
    %v1099 = vlaneseq
    %v1100 = vshrl.u32 %v1099, 7
    %v1101 = vsub.s32 0, %v1100
    %v1102 = vrot.slane %v1067, %v1101
    %v1103 = vlaneseq
    %v1104 = vshrl.u32 %v1103, 7
    %v1105 = vsub.s32 0, %v1104
    %v1106 = vrot.slane %v1071, %v1105
    %v1107 = vstv %s1039
    %v1108 = vsel %vm103, %v1082, %v1107
    %v1109 = vsel %vm103, %v1086, %v1107
    %v1110 = vsel %vm103, %v1090, %v1107
    %v1111 = vsel %vm103, %v1094, %v1107
    %v1112 = vsel %vm103, %v1098, %v1107
    %v1113 = vsel %vm103, %v1102, %v1107
    %v1114 = vsel %vm103, %v1106, %v1107
    %v1115 = vadd.f32 %v942, %v1108
    %v1116 = vadd.f32 %v943, %v1109
    %v1117 = vadd.f32 %v944, %v1110
    %v1118 = vadd.f32 %v945, %v1111
    %v1119 = vadd.f32 %v946, %v1112
    %v1120 = vadd.f32 %v947, %v1113
    %v1121 = vadd.f32 %v948, %v1114
    %v1122 = vmax.f32 %v1115, 0.0
    %v1123 = vmax.f32 %v1116, 0.0
    %v1124 = vmax.f32 %v1117, 0.0
    %v1125 = vmax.f32 %v1118, 0.0
    %v1126 = vmax.f32 %v1119, 0.0
    %v1127 = vmax.f32 %v1120, 0.0
    %v1128 = vmax.f32 %v1121, 0.0
    %s1129 = sld [smem:[#allocation9 + $0x13]]
    %v1130 = vstv %s1129
    %v1131 = vmul.f32 %v1130, %v1122
    %v1132 = vmul.f32 %v1130, %v1123
    %v1133 = vmul.f32 %v1130, %v1124
    %v1134 = vmul.f32 %v1130, %v1125
    %v1135 = vmul.f32 %v1130, %v1126
    %v1136 = vmul.f32 %v1130, %v1127
    %v1137 = vmul.f32 %v1130, %v1128
    %v1138 = vadd.f32 %v876, %v1131
    %v1139 = vadd.f32 %v877, %v1132
    %v1140 = vadd.f32 %v878, %v1133
    %v1141 = vadd.f32 %v879, %v1134
    %v1142 = vadd.f32 %v880, %v1135
    %v1143 = vadd.f32 %v881, %v1136
    %v1144 = vadd.f32 %v882, %v1137
    %s1145 = sld [smem:[#allocation9 + $0x14]]
    %v1146 = vstv %s1145
    %v1147 = vadd.f32 %v1138, %v1146
    %v1148 = vadd.f32 %v1139, %v1146
    %v1149 = vadd.f32 %v1140, %v1146
    %v1150 = vadd.f32 %v1141, %v1146
    %v1151 = vadd.f32 %v1142, %v1146
    %v1152 = vadd.f32 %v1143, %v1146
    %v1153 = vadd.f32 %v1144, %v1146
    %v1154 = vxor.u32 %v1147, 2147483648
    %v1155 = vxor.u32 %v1148, 2147483648
    %v1156 = vxor.u32 %v1149, 2147483648
    %v1157 = vxor.u32 %v1150, 2147483648
    %v1158 = vxor.u32 %v1151, 2147483648
    %v1159 = vxor.u32 %v1152, 2147483648
    %v1160 = vxor.u32 %v1153, 2147483648
    %v1161 = vmul.f32 %v1154, 1.442695
    %v1162 = vpow.pop %v1161
    %v1163 = vmul.f32 %v1155, 1.442695
    %v1164 = vpow.pop %v1163
    %v1165 = vmul.f32 %v1156, 1.442695
    %v1166 = vpow.pop %v1165
    %v1167 = vmul.f32 %v1157, 1.442695
    %v1168 = vpow.pop %v1167
    %v1169 = vmul.f32 %v1158, 1.442695
    %v1170 = vpow.pop %v1169
    %v1171 = vmul.f32 %v1159, 1.442695
    %v1172 = vpow.pop %v1171
    %v1173 = vmul.f32 %v1160, 1.442695
    %v1174 = vpow.pop %v1173
    %v1175 = vadd.f32 %v1162, 1.0
    %v1176 = vadd.f32 %v1164, 1.0
    %v1177 = vadd.f32 %v1166, 1.0
    %v1178 = vadd.f32 %v1168, 1.0
    %v1179 = vadd.f32 %v1170, 1.0
    %v1180 = vadd.f32 %v1172, 1.0
    %v1181 = vadd.f32 %v1174, 1.0
    %v1182 = vrcp.pop %v1175
    %v1183 = vmul.f32 1.0, %v1182
    %v1184 = vrcp.pop %v1176
    %v1185 = vmul.f32 1.0, %v1184
    %v1186 = vrcp.pop %v1177
    %v1187 = vmul.f32 1.0, %v1186
    %v1188 = vrcp.pop %v1178
    %v1189 = vmul.f32 1.0, %v1188
    %v1190 = vrcp.pop %v1179
    %v1191 = vmul.f32 1.0, %v1190
    %v1192 = vrcp.pop %v1180
    %v1193 = vmul.f32 1.0, %v1192
    %v1194 = vrcp.pop %v1181
    %v1195 = vmul.f32 1.0, %v1194
    %s1196 = sld [smem:[#allocation8 + $0x20]]
    %v1197 = vstv %s1196
    %v1198 = vmul.f32 %v1197, %v97
    %v1199 = vmul.f32 %v1197, %v98
    %v1200 = vmul.f32 %v1197, %v99
    %v1201 = vmul.f32 %v1197, %v100
    %s1202 = sld [smem:[#allocation8 + $0x21]]
    %v1203 = vstv %s1202
    %v1204 = vmul.f32 %v1203, %v97
    %v1205 = vmul.f32 %v1203, %v98
    %v1206 = vmul.f32 %v1203, %v99
    %v1207 = vmul.f32 %v1203, %v100
    %v1212 = vrot.slane %v1204, 5
    %v1213 = vrot.slane %v1212, 4
    %v1214 = vrot.slane %v1205, 5
    %v1215 = vrot.slane %v1214, 4
    %v1216 = vrot.slane %v1206, 5
    %v1217 = vrot.slane %v1216, 4
    %v1218 = vrot.slane %v1207, 5
    %v1219 = vrot.slane %v1218, 4
    %v1224 = vadd.f32 %v1198, %v1213
    %v1225 = vadd.f32 %v1199, %v1215
    %v1226 = vadd.f32 %v1200, %v1217
    %v1227 = vadd.f32 %v1201, %v1219
    %s1228 = sld [smem:[#allocation8 + $0x22]]
    %v1229 = vstv %s1228
    %v1230 = vmul.f32 %v1229, %v97
    %v1231 = vmul.f32 %v1229, %v98
    %v1232 = vmul.f32 %v1229, %v99
    %v1233 = vmul.f32 %v1229, %v100
    %v1238 = vrot.slane %v1230, 6
    %v1239 = vrot.slane %v1238, 4
    %v1240 = vrot.slane %v1231, 6
    %v1241 = vrot.slane %v1240, 4
    %v1242 = vrot.slane %v1232, 6
    %v1243 = vrot.slane %v1242, 4
    %v1244 = vrot.slane %v1233, 6
    %v1245 = vrot.slane %v1244, 4
    %v1250 = vadd.f32 %v1224, %v1239
    %v1251 = vadd.f32 %v1225, %v1241
    %v1252 = vadd.f32 %v1226, %v1243
    %v1253 = vadd.f32 %v1227, %v1245
    %s1254 = sld [smem:[#allocation8 + $0x23]]
    %v1255 = vstv %s1254
    %v1256 = vmul.f32 %v1255, %v97
    %v1257 = vmul.f32 %v1255, %v98
    %v1258 = vmul.f32 %v1255, %v99
    %v1259 = vmul.f32 %v1255, %v100
    %v1264 = vrot.slane %v1256, 7
    %v1265 = vrot.slane %v1264, 4
    %v1266 = vrot.slane %v1257, 7
    %v1267 = vrot.slane %v1266, 4
    %v1268 = vrot.slane %v1258, 7
    %v1269 = vrot.slane %v1268, 4
    %v1270 = vrot.slane %v1259, 7
    %v1271 = vrot.slane %v1270, 4
    %v1276 = vadd.f32 %v1250, %v1265
    %v1277 = vadd.f32 %v1251, %v1267
    %v1278 = vadd.f32 %v1252, %v1269
    %v1279 = vadd.f32 %v1253, %v1271
    %s1280 = sld [smem:[#allocation9 + $0xc]]
    %v1281 = vstv %s1280
    %v1282 = vadd.f32 %v1276, %v1281
    %v1283 = vadd.f32 %v1277, %v1281
    %v1284 = vadd.f32 %v1278, %v1281
    %v1285 = vadd.f32 %v1279, %v1281
    %v1290 = vlaneseq
    %v1291 = vshrl.u32 %v1290, 7
    %v1292 = vsub.s32 0, %v1291
    %v1293 = vrot.slane %v1282, %v1292
    %v1294 = vlaneseq
    %v1295 = vshrl.u32 %v1294, 7
    %v1296 = vsub.s32 4, %v1295
    %v1297 = vrot.slane %v1282, %v1296
    %v1298 = vlaneseq
    %v1299 = vshrl.u32 %v1298, 7
    %v1300 = vsub.s32 0, %v1299
    %v1301 = vrot.slane %v1283, %v1300
    %v1302 = vlaneseq
    %v1303 = vshrl.u32 %v1302, 7
    %v1304 = vsub.s32 4, %v1303
    %v1305 = vrot.slane %v1283, %v1304
    %v1306 = vlaneseq
    %v1307 = vshrl.u32 %v1306, 7
    %v1308 = vsub.s32 0, %v1307
    %v1309 = vrot.slane %v1284, %v1308
    %v1310 = vlaneseq
    %v1311 = vshrl.u32 %v1310, 7
    %v1312 = vsub.s32 4, %v1311
    %v1313 = vrot.slane %v1284, %v1312
    %v1314 = vlaneseq
    %v1315 = vshrl.u32 %v1314, 7
    %v1316 = vsub.s32 0, %v1315
    %v1317 = vrot.slane %v1285, %v1316
    %v1325 = vlaneseq
    %v1326 = vshrl.u32 %v1325, 7
    %v1327 = vsub.s32 0, %v1326
    %v1328 = vrot.slane %v1293, %v1327
    %v1329 = vlaneseq
    %v1330 = vshrl.u32 %v1329, 7
    %v1331 = vsub.s32 0, %v1330
    %v1332 = vrot.slane %v1297, %v1331
    %v1333 = vlaneseq
    %v1334 = vshrl.u32 %v1333, 7
    %v1335 = vsub.s32 0, %v1334
    %v1336 = vrot.slane %v1301, %v1335
    %v1337 = vlaneseq
    %v1338 = vshrl.u32 %v1337, 7
    %v1339 = vsub.s32 0, %v1338
    %v1340 = vrot.slane %v1305, %v1339
    %v1341 = vlaneseq
    %v1342 = vshrl.u32 %v1341, 7
    %v1343 = vsub.s32 0, %v1342
    %v1344 = vrot.slane %v1309, %v1343
    %v1345 = vlaneseq
    %v1346 = vshrl.u32 %v1345, 7
    %v1347 = vsub.s32 0, %v1346
    %v1348 = vrot.slane %v1313, %v1347
    %v1349 = vlaneseq
    %v1350 = vshrl.u32 %v1349, 7
    %v1351 = vsub.s32 0, %v1350
    %v1352 = vrot.slane %v1317, %v1351
    %v1353 = vsel %vm103, %v1328, %v1281
    %v1354 = vsel %vm103, %v1332, %v1281
    %v1355 = vsel %vm103, %v1336, %v1281
    %v1356 = vsel %vm103, %v1340, %v1281
    %v1357 = vsel %vm103, %v1344, %v1281
    %v1358 = vsel %vm103, %v1348, %v1281
    %v1359 = vsel %vm103, %v1352, %v1281
    %v1360 = vmul.f32 %v1353, %v1183
    %v1361 = vmul.f32 %v1354, %v1185
    %v1362 = vmul.f32 %v1355, %v1187
    %v1363 = vmul.f32 %v1356, %v1189
    %v1364 = vmul.f32 %v1357, %v1191
    %v1365 = vmul.f32 %v1358, %v1193
    %v1366 = vmul.f32 %v1359, %v1195
    %1367 = vst [vmem:[#allocation11] sm:$0xff] %v1360
    %1368 = vst [vmem:[#allocation11 + $0x8] sm:$0xff] %v1361
    %1369 = vst [vmem:[#allocation11 + $0x10] sm:$0xff] %v1362
    %1370 = vst [vmem:[#allocation11 + $0x18] sm:$0xff] %v1363
    %1371 = vst [vmem:[#allocation11 + $0x20] sm:$0xff] %v1364
    %1372 = vst [vmem:[#allocation11 + $0x28] sm:$0xff] %v1365
    %1373 = vst [vmem:[#allocation11 + $0x30] sm:$0xff] %v1366
    %s1374 = sld [smem:[#allocation8 + $0x24]]
    %v1375 = vstv %s1374
    %v1376 = vmul.f32 %v1375, %v97
    %v1377 = vmul.f32 %v1375, %v98
    %v1378 = vmul.f32 %v1375, %v99
    %v1379 = vmul.f32 %v1375, %v100
    %s1380 = sld [smem:[#allocation8 + $0x25]]
    %v1381 = vstv %s1380
    %v1382 = vmul.f32 %v1381, %v97
    %v1383 = vmul.f32 %v1381, %v98
    %v1384 = vmul.f32 %v1381, %v99
    %v1385 = vmul.f32 %v1381, %v100
    %v1390 = vrot.slane %v1382, 5
    %v1391 = vrot.slane %v1390, 4
    %v1392 = vrot.slane %v1383, 5
    %v1393 = vrot.slane %v1392, 4
    %v1394 = vrot.slane %v1384, 5
    %v1395 = vrot.slane %v1394, 4
    %v1396 = vrot.slane %v1385, 5
    %v1397 = vrot.slane %v1396, 4
    %v1402 = vadd.f32 %v1376, %v1391
    %v1403 = vadd.f32 %v1377, %v1393
    %v1404 = vadd.f32 %v1378, %v1395
    %v1405 = vadd.f32 %v1379, %v1397
    %s1406 = sld [smem:[#allocation8 + $0x26]]
    %v1407 = vstv %s1406
    %v1408 = vmul.f32 %v1407, %v97
    %v1409 = vmul.f32 %v1407, %v98
    %v1410 = vmul.f32 %v1407, %v99
    %v1411 = vmul.f32 %v1407, %v100
    %v1416 = vrot.slane %v1408, 6
    %v1417 = vrot.slane %v1416, 4
    %v1418 = vrot.slane %v1409, 6
    %v1419 = vrot.slane %v1418, 4
    %v1420 = vrot.slane %v1410, 6
    %v1421 = vrot.slane %v1420, 4
    %v1422 = vrot.slane %v1411, 6
    %v1423 = vrot.slane %v1422, 4
    %v1428 = vadd.f32 %v1402, %v1417
    %v1429 = vadd.f32 %v1403, %v1419
    %v1430 = vadd.f32 %v1404, %v1421
    %v1431 = vadd.f32 %v1405, %v1423
    %s1432 = sld [smem:[#allocation8 + $0x27]]
    %v1433 = vstv %s1432
    %v1434 = vmul.f32 %v1433, %v97
    %v1435 = vmul.f32 %v1433, %v98
    %v1436 = vmul.f32 %v1433, %v99
    %v1437 = vmul.f32 %v1433, %v100
    %v1442 = vrot.slane %v1434, 7
    %v1443 = vrot.slane %v1442, 4
    %v1444 = vrot.slane %v1435, 7
    %v1445 = vrot.slane %v1444, 4
    %v1446 = vrot.slane %v1436, 7
    %v1447 = vrot.slane %v1446, 4
    %v1448 = vrot.slane %v1437, 7
    %v1449 = vrot.slane %v1448, 4
    %v1454 = vadd.f32 %v1428, %v1443
    %v1455 = vadd.f32 %v1429, %v1445
    %v1456 = vadd.f32 %v1430, %v1447
    %v1457 = vadd.f32 %v1431, %v1449
    %s1458 = sld [smem:[#allocation9 + $0xd]]
    %v1459 = vstv %s1458
    %v1460 = vadd.f32 %v1454, %v1459
    %v1461 = vadd.f32 %v1455, %v1459
    %v1462 = vadd.f32 %v1456, %v1459
    %v1463 = vadd.f32 %v1457, %v1459
    %v1468 = vlaneseq
    %v1469 = vshrl.u32 %v1468, 7
    %v1470 = vsub.s32 0, %v1469
    %v1471 = vrot.slane %v1460, %v1470
    %v1472 = vlaneseq
    %v1473 = vshrl.u32 %v1472, 7
    %v1474 = vsub.s32 4, %v1473
    %v1475 = vrot.slane %v1460, %v1474
    %v1476 = vlaneseq
    %v1477 = vshrl.u32 %v1476, 7
    %v1478 = vsub.s32 0, %v1477
    %v1479 = vrot.slane %v1461, %v1478
    %v1480 = vlaneseq
    %v1481 = vshrl.u32 %v1480, 7
    %v1482 = vsub.s32 4, %v1481
    %v1483 = vrot.slane %v1461, %v1482
    %v1484 = vlaneseq
    %v1485 = vshrl.u32 %v1484, 7
    %v1486 = vsub.s32 0, %v1485
    %v1487 = vrot.slane %v1462, %v1486
    %v1488 = vlaneseq
    %v1489 = vshrl.u32 %v1488, 7
    %v1490 = vsub.s32 4, %v1489
    %v1491 = vrot.slane %v1462, %v1490
    %v1492 = vlaneseq
    %v1493 = vshrl.u32 %v1492, 7
    %v1494 = vsub.s32 0, %v1493
    %v1495 = vrot.slane %v1463, %v1494
    %v1503 = vlaneseq
    %v1504 = vshrl.u32 %v1503, 7
    %v1505 = vsub.s32 0, %v1504
    %v1506 = vrot.slane %v1471, %v1505
    %v1507 = vlaneseq
    %v1508 = vshrl.u32 %v1507, 7
    %v1509 = vsub.s32 0, %v1508
    %v1510 = vrot.slane %v1475, %v1509
    %v1511 = vlaneseq
    %v1512 = vshrl.u32 %v1511, 7
    %v1513 = vsub.s32 0, %v1512
    %v1514 = vrot.slane %v1479, %v1513
    %v1515 = vlaneseq
    %v1516 = vshrl.u32 %v1515, 7
    %v1517 = vsub.s32 0, %v1516
    %v1518 = vrot.slane %v1483, %v1517
    %v1519 = vlaneseq
    %v1520 = vshrl.u32 %v1519, 7
    %v1521 = vsub.s32 0, %v1520
    %v1522 = vrot.slane %v1487, %v1521
    %v1523 = vlaneseq
    %v1524 = vshrl.u32 %v1523, 7
    %v1525 = vsub.s32 0, %v1524
    %v1526 = vrot.slane %v1491, %v1525
    %v1527 = vlaneseq
    %v1528 = vshrl.u32 %v1527, 7
    %v1529 = vsub.s32 0, %v1528
    %v1530 = vrot.slane %v1495, %v1529
    %v1531 = vsel %vm103, %v1506, %v1459
    %v1532 = vsel %vm103, %v1510, %v1459
    %v1533 = vsel %vm103, %v1514, %v1459
    %v1534 = vsel %vm103, %v1518, %v1459
    %v1535 = vsel %vm103, %v1522, %v1459
    %v1536 = vsel %vm103, %v1526, %v1459
    %v1537 = vsel %vm103, %v1530, %v1459
    %v1538 = vmul.f32 %v1531, %v1183
    %v1539 = vmul.f32 %v1532, %v1185
    %v1540 = vmul.f32 %v1533, %v1187
    %v1541 = vmul.f32 %v1534, %v1189
    %v1542 = vmul.f32 %v1535, %v1191
    %v1543 = vmul.f32 %v1536, %v1193
    %v1544 = vmul.f32 %v1537, %v1195
    %s1545 = scalar_lea.vmem [#allocation11], 56
    %1546 = vst [vmem:[%s1545] sm:$0xff] %v1538
    %1547 = vst [vmem:[%s1545 + $0x8] sm:$0xff] %v1539
    %1548 = vst [vmem:[%s1545 + $0x10] sm:$0xff] %v1540
    %1549 = vst [vmem:[%s1545 + $0x18] sm:$0xff] %v1541
    %1550 = vst [vmem:[%s1545 + $0x20] sm:$0xff] %v1542
    %1551 = vst [vmem:[%s1545 + $0x28] sm:$0xff] %v1543
    %1552 = vst [vmem:[%s1545 + $0x30] sm:$0xff] %v1544
    %s1553 = sld [smem:[#allocation8 + $0x28]]
    %v1554 = vstv %s1553
    %v1555 = vmul.f32 %v1554, %v97
    %v1556 = vmul.f32 %v1554, %v98
    %v1557 = vmul.f32 %v1554, %v99
    %v1558 = vmul.f32 %v1554, %v100
    %s1559 = sld [smem:[#allocation8 + $0x29]]
    %v1560 = vstv %s1559
    %v1561 = vmul.f32 %v1560, %v97
    %v1562 = vmul.f32 %v1560, %v98
    %v1563 = vmul.f32 %v1560, %v99
    %v1564 = vmul.f32 %v1560, %v100
    %v1569 = vrot.slane %v1561, 5
    %v1570 = vrot.slane %v1569, 4
    %v1571 = vrot.slane %v1562, 5
    %v1572 = vrot.slane %v1571, 4
    %v1573 = vrot.slane %v1563, 5
    %v1574 = vrot.slane %v1573, 4
    %v1575 = vrot.slane %v1564, 5
    %v1576 = vrot.slane %v1575, 4
    %v1581 = vadd.f32 %v1555, %v1570
    %v1582 = vadd.f32 %v1556, %v1572
    %v1583 = vadd.f32 %v1557, %v1574
    %v1584 = vadd.f32 %v1558, %v1576
    %s1585 = sld [smem:[#allocation8 + $0x2a]]
    %v1586 = vstv %s1585
    %v1587 = vmul.f32 %v1586, %v97
    %v1588 = vmul.f32 %v1586, %v98
    %v1589 = vmul.f32 %v1586, %v99
    %v1590 = vmul.f32 %v1586, %v100
    %v1595 = vrot.slane %v1587, 6
    %v1596 = vrot.slane %v1595, 4
    %v1597 = vrot.slane %v1588, 6
    %v1598 = vrot.slane %v1597, 4
    %v1599 = vrot.slane %v1589, 6
    %v1600 = vrot.slane %v1599, 4
    %v1601 = vrot.slane %v1590, 6
    %v1602 = vrot.slane %v1601, 4
    %v1607 = vadd.f32 %v1581, %v1596
    %v1608 = vadd.f32 %v1582, %v1598
    %v1609 = vadd.f32 %v1583, %v1600
    %v1610 = vadd.f32 %v1584, %v1602
    %s1611 = sld [smem:[#allocation8 + $0x2b]]
    %v1612 = vstv %s1611
    %v1613 = vmul.f32 %v1612, %v97
    %v1614 = vmul.f32 %v1612, %v98
    %v1615 = vmul.f32 %v1612, %v99
    %v1616 = vmul.f32 %v1612, %v100
    %v1621 = vrot.slane %v1613, 7
    %v1622 = vrot.slane %v1621, 4
    %v1623 = vrot.slane %v1614, 7
    %v1624 = vrot.slane %v1623, 4
    %v1625 = vrot.slane %v1615, 7
    %v1626 = vrot.slane %v1625, 4
    %v1627 = vrot.slane %v1616, 7
    %v1628 = vrot.slane %v1627, 4
    %v1633 = vadd.f32 %v1607, %v1622
    %v1634 = vadd.f32 %v1608, %v1624
    %v1635 = vadd.f32 %v1609, %v1626
    %v1636 = vadd.f32 %v1610, %v1628
    %s1637 = sld [smem:[#allocation9 + $0xe]]
    %v1638 = vstv %s1637
    %v1639 = vadd.f32 %v1633, %v1638
    %v1640 = vadd.f32 %v1634, %v1638
    %v1641 = vadd.f32 %v1635, %v1638
    %v1642 = vadd.f32 %v1636, %v1638
    %v1647 = vlaneseq
    %v1648 = vshrl.u32 %v1647, 7
    %v1649 = vsub.s32 0, %v1648
    %v1650 = vrot.slane %v1639, %v1649
    %v1651 = vlaneseq
    %v1652 = vshrl.u32 %v1651, 7
    %v1653 = vsub.s32 4, %v1652
    %v1654 = vrot.slane %v1639, %v1653
    %v1655 = vlaneseq
    %v1656 = vshrl.u32 %v1655, 7
    %v1657 = vsub.s32 0, %v1656
    %v1658 = vrot.slane %v1640, %v1657
    %v1659 = vlaneseq
    %v1660 = vshrl.u32 %v1659, 7
    %v1661 = vsub.s32 4, %v1660
    %v1662 = vrot.slane %v1640, %v1661
    %v1663 = vlaneseq
    %v1664 = vshrl.u32 %v1663, 7
    %v1665 = vsub.s32 0, %v1664
    %v1666 = vrot.slane %v1641, %v1665
    %v1667 = vlaneseq
    %v1668 = vshrl.u32 %v1667, 7
    %v1669 = vsub.s32 4, %v1668
    %v1670 = vrot.slane %v1641, %v1669
    %v1671 = vlaneseq
    %v1672 = vshrl.u32 %v1671, 7
    %v1673 = vsub.s32 0, %v1672
    %v1674 = vrot.slane %v1642, %v1673
    %v1682 = vlaneseq
    %v1683 = vshrl.u32 %v1682, 7
    %v1684 = vsub.s32 0, %v1683
    %v1685 = vrot.slane %v1650, %v1684
    %v1686 = vlaneseq
    %v1687 = vshrl.u32 %v1686, 7
    %v1688 = vsub.s32 0, %v1687
    %v1689 = vrot.slane %v1654, %v1688
    %v1690 = vlaneseq
    %v1691 = vshrl.u32 %v1690, 7
    %v1692 = vsub.s32 0, %v1691
    %v1693 = vrot.slane %v1658, %v1692
    %v1694 = vlaneseq
    %v1695 = vshrl.u32 %v1694, 7
    %v1696 = vsub.s32 0, %v1695
    %v1697 = vrot.slane %v1662, %v1696
    %v1698 = vlaneseq
    %v1699 = vshrl.u32 %v1698, 7
    %v1700 = vsub.s32 0, %v1699
    %v1701 = vrot.slane %v1666, %v1700
    %v1702 = vlaneseq
    %v1703 = vshrl.u32 %v1702, 7
    %v1704 = vsub.s32 0, %v1703
    %v1705 = vrot.slane %v1670, %v1704
    %v1706 = vlaneseq
    %v1707 = vshrl.u32 %v1706, 7
    %v1708 = vsub.s32 0, %v1707
    %v1709 = vrot.slane %v1674, %v1708
    %v1710 = vsel %vm103, %v1685, %v1638
    %v1711 = vsel %vm103, %v1689, %v1638
    %v1712 = vsel %vm103, %v1693, %v1638
    %v1713 = vsel %vm103, %v1697, %v1638
    %v1714 = vsel %vm103, %v1701, %v1638
    %v1715 = vsel %vm103, %v1705, %v1638
    %v1716 = vsel %vm103, %v1709, %v1638
    %v1717 = vmul.f32 %v1710, %v1183
    %v1718 = vmul.f32 %v1711, %v1185
    %v1719 = vmul.f32 %v1712, %v1187
    %v1720 = vmul.f32 %v1713, %v1189
    %v1721 = vmul.f32 %v1714, %v1191
    %v1722 = vmul.f32 %v1715, %v1193
    %v1723 = vmul.f32 %v1716, %v1195
    %s1724 = scalar_lea.vmem [#allocation11], 112
    %1725 = vst [vmem:[%s1724] sm:$0xff] %v1717
    %1726 = vst [vmem:[%s1724 + $0x8] sm:$0xff] %v1718
    %1727 = vst [vmem:[%s1724 + $0x10] sm:$0xff] %v1719
    %1728 = vst [vmem:[%s1724 + $0x18] sm:$0xff] %v1720
    %1729 = vst [vmem:[%s1724 + $0x20] sm:$0xff] %v1721
    %1730 = vst [vmem:[%s1724 + $0x28] sm:$0xff] %v1722
    %1731 = vst [vmem:[%s1724 + $0x30] sm:$0xff] %v1723
    %s1732 = sld [smem:[#allocation8 + $0x2c]]
    %v1733 = vstv %s1732
    %v1734 = vmul.f32 %v1733, %v97
    %v1735 = vmul.f32 %v1733, %v98
    %v1736 = vmul.f32 %v1733, %v99
    %v1737 = vmul.f32 %v1733, %v100
    %s1738 = sld [smem:[#allocation8 + $0x2d]]
    %v1739 = vstv %s1738
    %v1740 = vmul.f32 %v1739, %v97
    %v1741 = vmul.f32 %v1739, %v98
    %v1742 = vmul.f32 %v1739, %v99
    %v1743 = vmul.f32 %v1739, %v100
    %v1748 = vrot.slane %v1740, 5
    %v1749 = vrot.slane %v1748, 4
    %v1750 = vrot.slane %v1741, 5
    %v1751 = vrot.slane %v1750, 4
    %v1752 = vrot.slane %v1742, 5
    %v1753 = vrot.slane %v1752, 4
    %v1754 = vrot.slane %v1743, 5
    %v1755 = vrot.slane %v1754, 4
    %v1760 = vadd.f32 %v1734, %v1749
    %v1761 = vadd.f32 %v1735, %v1751
    %v1762 = vadd.f32 %v1736, %v1753
    %v1763 = vadd.f32 %v1737, %v1755
    %s1764 = sld [smem:[#allocation8 + $0x2e]]
    %v1765 = vstv %s1764
    %v1766 = vmul.f32 %v1765, %v97
    %v1767 = vmul.f32 %v1765, %v98
    %v1768 = vmul.f32 %v1765, %v99
    %v1769 = vmul.f32 %v1765, %v100
    %v1774 = vrot.slane %v1766, 6
    %v1775 = vrot.slane %v1774, 4
    %v1776 = vrot.slane %v1767, 6
    %v1777 = vrot.slane %v1776, 4
    %v1778 = vrot.slane %v1768, 6
    %v1779 = vrot.slane %v1778, 4
    %v1780 = vrot.slane %v1769, 6
    %v1781 = vrot.slane %v1780, 4
    %v1786 = vadd.f32 %v1760, %v1775
    %v1787 = vadd.f32 %v1761, %v1777
    %v1788 = vadd.f32 %v1762, %v1779
    %v1789 = vadd.f32 %v1763, %v1781
    %s1790 = sld [smem:[#allocation8 + $0x2f]]
    %v1791 = vstv %s1790
    %v1792 = vmul.f32 %v1791, %v97
    %v1793 = vmul.f32 %v1791, %v98
    %v1794 = vmul.f32 %v1791, %v99
    %v1795 = vmul.f32 %v1791, %v100
    %v1800 = vrot.slane %v1792, 7
    %v1801 = vrot.slane %v1800, 4
    %v1802 = vrot.slane %v1793, 7
    %v1803 = vrot.slane %v1802, 4
    %v1804 = vrot.slane %v1794, 7
    %v1805 = vrot.slane %v1804, 4
    %v1806 = vrot.slane %v1795, 7
    %v1807 = vrot.slane %v1806, 4
    %v1812 = vadd.f32 %v1786, %v1801
    %v1813 = vadd.f32 %v1787, %v1803
    %v1814 = vadd.f32 %v1788, %v1805
    %v1815 = vadd.f32 %v1789, %v1807
    %s1816 = sld [smem:[#allocation9 + $0xf]]
    %v1817 = vstv %s1816
    %v1818 = vadd.f32 %v1812, %v1817
    %v1819 = vadd.f32 %v1813, %v1817
    %v1820 = vadd.f32 %v1814, %v1817
    %v1821 = vadd.f32 %v1815, %v1817
    %v1826 = vlaneseq
    %v1827 = vshrl.u32 %v1826, 7
    %v1828 = vsub.s32 0, %v1827
    %v1829 = vrot.slane %v1818, %v1828
    %v1830 = vlaneseq
    %v1831 = vshrl.u32 %v1830, 7
    %v1832 = vsub.s32 4, %v1831
    %v1833 = vrot.slane %v1818, %v1832
    %v1834 = vlaneseq
    %v1835 = vshrl.u32 %v1834, 7
    %v1836 = vsub.s32 0, %v1835
    %v1837 = vrot.slane %v1819, %v1836
    %v1838 = vlaneseq
    %v1839 = vshrl.u32 %v1838, 7
    %v1840 = vsub.s32 4, %v1839
    %v1841 = vrot.slane %v1819, %v1840
    %v1842 = vlaneseq
    %v1843 = vshrl.u32 %v1842, 7
    %v1844 = vsub.s32 0, %v1843
    %v1845 = vrot.slane %v1820, %v1844
    %v1846 = vlaneseq
    %v1847 = vshrl.u32 %v1846, 7
    %v1848 = vsub.s32 4, %v1847
    %v1849 = vrot.slane %v1820, %v1848
    %v1850 = vlaneseq
    %v1851 = vshrl.u32 %v1850, 7
    %v1852 = vsub.s32 0, %v1851
    %v1853 = vrot.slane %v1821, %v1852
    %v1861 = vlaneseq
    %v1862 = vshrl.u32 %v1861, 7
    %v1863 = vsub.s32 0, %v1862
    %v1864 = vrot.slane %v1829, %v1863
    %v1865 = vlaneseq
    %v1866 = vshrl.u32 %v1865, 7
    %v1867 = vsub.s32 0, %v1866
    %v1868 = vrot.slane %v1833, %v1867
    %v1869 = vlaneseq
    %v1870 = vshrl.u32 %v1869, 7
    %v1871 = vsub.s32 0, %v1870
    %v1872 = vrot.slane %v1837, %v1871
    %v1873 = vlaneseq
    %v1874 = vshrl.u32 %v1873, 7
    %v1875 = vsub.s32 0, %v1874
    %v1876 = vrot.slane %v1841, %v1875
    %v1877 = vlaneseq
    %v1878 = vshrl.u32 %v1877, 7
    %v1879 = vsub.s32 0, %v1878
    %v1880 = vrot.slane %v1845, %v1879
    %v1881 = vlaneseq
    %v1882 = vshrl.u32 %v1881, 7
    %v1883 = vsub.s32 0, %v1882
    %v1884 = vrot.slane %v1849, %v1883
    %v1885 = vlaneseq
    %v1886 = vshrl.u32 %v1885, 7
    %v1887 = vsub.s32 0, %v1886
    %v1888 = vrot.slane %v1853, %v1887
    %v1889 = vsel %vm103, %v1864, %v1817
    %v1890 = vsel %vm103, %v1868, %v1817
    %v1891 = vsel %vm103, %v1872, %v1817
    %v1892 = vsel %vm103, %v1876, %v1817
    %v1893 = vsel %vm103, %v1880, %v1817
    %v1894 = vsel %vm103, %v1884, %v1817
    %v1895 = vsel %vm103, %v1888, %v1817
    %v1896 = vmul.f32 %v1889, %v1183
    %v1897 = vmul.f32 %v1890, %v1185
    %v1898 = vmul.f32 %v1891, %v1187
    %v1899 = vmul.f32 %v1892, %v1189
    %v1900 = vmul.f32 %v1893, %v1191
    %v1901 = vmul.f32 %v1894, %v1193
    %v1902 = vmul.f32 %v1895, %v1195
    %s1903 = scalar_lea.vmem [#allocation11], 168
    %1904 = vst [vmem:[%s1903] sm:$0xff] %v1896
    %1905 = vst [vmem:[%s1903 + $0x8] sm:$0xff] %v1897
    %1906 = vst [vmem:[%s1903 + $0x10] sm:$0xff] %v1898
    %1907 = vst [vmem:[%s1903 + $0x18] sm:$0xff] %v1899
    %1908 = vst [vmem:[%s1903 + $0x20] sm:$0xff] %v1900
    %1909 = vst [vmem:[%s1903 + $0x28] sm:$0xff] %v1901
    %1910 = vst [vmem:[%s1903 + $0x30] sm:$0xff] %v1902
    // Predicated region
    $region34: #{tpu_custom_call.1} parent=1 // pred_check
      _
    $region35: #{tpu_custom_call.1} parent=1 // pred_check_branch
      %1912 = sbr.rel (0) target = $region37
    $region36: #{tpu_custom_call.1} parent=1 // pred_region
      %s1914 = ssub.s32 3584, 3584
      %1915 = vsyncadd [#allocation4], %s1914
      %s1916 = sshll.u32 [#allocation11], 4
      %s1917 = int_to_ptr.vmem [resolvable:$true] %s1916
      %1922 = dma.vmem_to_hbm [thread:$0]  %s1917, 3584, %s4, [#allocation4], 896, 896, 56
    $region37: #{tpu_custom_call.1} parent=1 // pred_fallthru
      _
    // Predicated region
    $region38: #{tpu_custom_call.1} parent=1 // pred_check
      _
    $region39: #{tpu_custom_call.1} parent=1 // pred_check_branch
      %1924 = sbr.rel (0) target = $region41
    $region40: #{tpu_custom_call.1} parent=1 // pred_region
      %1925 = dma.done [#allocation4], 3584
    $region41: #{tpu_custom_call.1} parent=1 // pred_fallthru
      _
    %1926 = vsyncpa [#allocation3], 1
    %1927 = vsyncpa [#allocation7], 1
    %1928 = vsyncpa [#allocation4], 1
    %1929 = vsyncpa [#allocation5], 1
    %1930 = vsyncpa [#allocation10], 1

</llo_original>
